<compile_context>
chip_gen: v5e
topology: v5e:2x2
jax: 0.10.0
libtpu: 0.0.40
codegen_flags: <defaults>
</compile_context>

<pallas_src>
import math
import functools

import jax
import jax.numpy as jnp
from jax.experimental import pallas as pl
from jax.experimental.pallas import tpu as pltpu

_LN_EPS = 1e-5


# ---------------------------- fused Pallas kernel ----------------------------

def _decoder_layer_kernel(
    x_ref, enc_ref, pe_ref, dpos_ref, epos_ref,
    wqk_s_ref, bqk_s_ref, wv_s_ref, bv_s_ref, wo_s_ref, bo_s_ref,
    wq_c_ref, bq_c_ref, wk_c_ref, bk_c_ref, wv_c_ref, bv_c_ref, wo_c_ref, bo_c_ref,
    w1_ref, b1_ref, w2_ref, b2_ref,
    g1_ref, be1_ref, g2_ref, be2_ref, g3_ref, be3_ref,
    o_ref, *, n_heads, pre_norm, mxu_dtype):
    B, L, E = x_ref.shape
    S = enc_ref.shape[1]
    H = n_heads
    Dh = E // H

    def layer_norm(v, g_ref, b_ref):
        mu = jnp.mean(v, axis=-1, keepdims=True)
        var = jnp.mean(jnp.square(v - mu), axis=-1, keepdims=True)
        return (v - mu) * jax.lax.rsqrt(var + _LN_EPS) * g_ref[...] + b_ref[...]

    def proj(a2d, w_ref, b_ref):
        # Pre-transposed (in, out) weight; bf16 operands, f32 MXU accumulation, f32 bias.
        return (jnp.dot(a2d.astype(mxu_dtype), w_ref[...],
                        preferred_element_type=jnp.float32) + b_ref[...])

    def mha(qp, kp, vp, wo_ref, bo_ref):
        # qp: (B, Lq, E), kp/vp: (B, Lk, E).  The 1/sqrt(Dh) scale is already folded
        # into the q projection weights (wrapper).  Leading-batch-dim einsums + a small
        # static head loop; heads concatenated once -> single output projection.
        Lq = qp.shape[1]
        qb = qp.astype(mxu_dtype)
        kb = kp.astype(mxu_dtype)
        vb = vp.astype(mxu_dtype)
        heads = []
        for h in range(H):
            sl = slice(h * Dh, (h + 1) * Dh)
            s = jnp.einsum('bld,bsd->bls', qb[:, :, sl], kb[:, :, sl],
                           preferred_element_type=jnp.float32)            # (B, Lq, Lk)
            m = jnp.max(s, axis=-1, keepdims=True)
            p = jnp.exp(s - m)
            p = p * pl.reciprocal(jnp.sum(p, axis=-1, keepdims=True), approx=True)
            heads.append(jnp.einsum('bls,bsd->bld', p.astype(mxu_dtype), vb[:, :, sl],
                                    preferred_element_type=jnp.float32))  # (B, Lq, Dh)
        ao = jnp.concatenate(heads, axis=-1).reshape(B * Lq, E)
        out = (jnp.dot(ao.astype(mxu_dtype), wo_ref[...],
                       preferred_element_type=jnp.float32) + bo_ref[...])
        return out.reshape(B, Lq, E)

    x = x_ref[...].astype(jnp.float32)       # (B, L, E)
    enc = enc_ref[...].astype(jnp.float32)   # (B, S, E)
    pe = pe_ref[...]                         # (B, 1, E)
    dpos = dpos_ref[...]                     # (1, L, E)
    epos = epos_ref[...]                     # (1, S, E)

    # ----- self-attention block -----
    skip = x
    xa = layer_norm(x, g1_ref, be1_ref) if pre_norm else x
    qk_in = xa + pe                          # PE indexed by batch (faithful to reference)
    qkp = proj(qk_in.reshape(B * L, E), wqk_s_ref, bqk_s_ref)    # fused Wq|Wk -> (B*L, 2E)
    qp = qkp[:, :E].reshape(B, L, E)
    kp = qkp[:, E:].reshape(B, L, E)
    vp = proj(xa.reshape(B * L, E), wv_s_ref, bv_s_ref).reshape(B, L, E)
    x = skip + mha(qp, kp, vp, wo_s_ref, bo_s_ref)               # dropout1 = identity

    # ----- cross-attention block -----
    if pre_norm:
        skip = x
        xc = layer_norm(x, g2_ref, be2_ref)
    else:
        x = layer_norm(x, g1_ref, be1_ref)
        skip = x
        xc = x
    q_in = xc + dpos
    k_in = enc + epos                        # key gets encoder pos-embed; value does not
    qp = proj(q_in.reshape(B * L, E), wq_c_ref, bq_c_ref).reshape(B, L, E)
    kp = proj(k_in.reshape(B * S, E), wk_c_ref, bk_c_ref).reshape(B, S, E)
    vp = proj(enc.reshape(B * S, E), wv_c_ref, bv_c_ref).reshape(B, S, E)
    x = skip + mha(qp, kp, vp, wo_c_ref, bo_c_ref)               # dropout2 = identity

    # ----- feed-forward block -----
    if pre_norm:
        skip = x
        xf = layer_norm(x, g3_ref, be3_ref)
    else:
        x = layer_norm(x, g2_ref, be2_ref)
        skip = x
        xf = x
    hmid = jnp.maximum(proj(xf.reshape(B * L, E), w1_ref, b1_ref), 0.0)   # ReLU
    y = proj(hmid, w2_ref, b2_ref).reshape(B, L, E)
    x = skip + y                                                 # dropout3 = identity
    if not pre_norm:
        x = layer_norm(x, g3_ref, be3_ref)

    o_ref[...] = x.astype(o_ref.dtype)       # single full-block store


# ---------------------------- wrapper ----------------------------

def positional_encoding(d_model, n_positions):
    # Same construction as PositionalEncoding.__init__ (interleaved sin/cos), but only
    # the rows actually consumed are materialised (not the full 5000-row table).
    position = jnp.arange(n_positions, dtype=jnp.float32)[:, None]
    div_term = jnp.exp(jnp.arange(0, d_model, 2, dtype=jnp.float32)
                       * (-math.log(10000.0) / d_model))
    ang = position * div_term
    return jnp.stack([jnp.sin(ang), jnp.cos(ang)], axis=-1).reshape(n_positions, d_model)


def act_decoder_layer(params, x, encoder_out,
                      decoder_pos_embed=None, encoder_pos_embed=None,
                      pre_norm=False, n_heads=4, mxu_dtype=jnp.bfloat16):
    """x: (DS, B, C), encoder_out: (ES, B, C) -> (DS, B, C).  Eval mode (dropout = id)."""
    DS, B, E = x.shape
    ES = encoder_out.shape[0]
    scale = 1.0 / math.sqrt(E // n_heads)

    # NB: faithful to the reference: pos_encoder adds encoding[:, :x.size(1)], i.e. the
    # first B rows, broadcast over the *sequence* dimension (position indexed by batch).
    pe = positional_encoding(E, B).reshape(B, 1, E).astype(jnp.float32)

    # Batch-first internal layout -> leading-batch-dim einsums inside the kernel.
    x_bf = jnp.transpose(x, (1, 0, 2)).astype(jnp.float32)              # (B, DS, E)
    enc_bf = jnp.transpose(encoder_out, (1, 0, 2)).astype(jnp.float32)  # (B, ES, E)
    dpos = (jnp.zeros((1, DS, E), jnp.float32) if decoder_pos_embed is None
            else jnp.transpose(decoder_pos_embed, (1, 0, 2)).astype(jnp.float32))
    epos = (jnp.zeros((1, ES, E), jnp.float32) if encoder_pos_embed is None
            else jnp.transpose(encoder_pos_embed, (1, 0, 2)).astype(jnp.float32))

    sa, ca = params["self_attn"], params["cross_attn"]
    wt = lambda m: jnp.asarray(m).T.astype(mxu_dtype)                 # pre-transposed MXU weight
    bv = lambda v: jnp.asarray(v).reshape(1, -1).astype(jnp.float32)  # f32 bias / LN param

    # Fold the attention scale into the q projections (exact: (x@(sWq).T + s*bq) = s*q).
    # Self-attention: q and k share the same input (x + pe) -> fuse Wq|Wk in one matmul.
    wqk_s = jnp.concatenate([scale * jnp.asarray(sa["wq"]).T, jnp.asarray(sa["wk"]).T],
                            axis=1).astype(mxu_dtype)                 # (E, 2E)
    bqk_s = jnp.concatenate([scale * jnp.asarray(sa["bq"]),
                             jnp.asarray(sa["bk"])]).reshape(1, -1).astype(jnp.float32)
    wq_c = (scale * jnp.asarray(ca["wq"]).T).astype(mxu_dtype)
    bq_c = (scale * jnp.asarray(ca["bq"])).reshape(1, -1).astype(jnp.float32)

    args = (
        x_bf, enc_bf, pe, dpos, epos,
        wqk_s, bqk_s, wt(sa["wv"]), bv(sa["bv"]), wt(sa["wo"]), bv(sa["bo"]),
        wq_c, bq_c, wt(ca["wk"]), bv(ca["bk"]),
        wt(ca["wv"]), bv(ca["bv"]), wt(ca["wo"]), bv(ca["bo"]),
        wt(params["w1"]), bv(params["b1"]), wt(params["w2"]), bv(params["b2"]),
        bv(params["norm1_g"]), bv(params["norm1_b"]),
        bv(params["norm2_g"]), bv(params["norm2_b"]),
        bv(params["norm3_g"]), bv(params["norm3_b"]),
    )

    kernel = functools.partial(_decoder_layer_kernel, n_heads=n_heads,
                               pre_norm=pre_norm, mxu_dtype=mxu_dtype)
    out_bf = pl.pallas_call(
        kernel,
        out_shape=jax.ShapeDtypeStruct((B, DS, E), x.dtype),
        in_specs=[pl.BlockSpec(memory_space=pltpu.MemorySpace.VMEM) for _ in args],
        out_specs=pl.BlockSpec(memory_space=pltpu.MemorySpace.VMEM),
        # TODO(synk): at production ACT sizes (dim_model=512, FF=3200, long encoder seq)
        # add a grid over the decoder/encoder sequence + CompilerParams(vmem_limit_bytes=)
        # so the fused layer stays under the v7x 64 MiB VMEM ceiling.
    )(*args)
    return jnp.transpose(out_bf, (1, 0, 2))


# ---------------------------- pure-JAX reference (for validation) ----------------------------

def _ref_decoder_layer(params, x, encoder_out, dpos, epos, pre_norm, n_heads):
    DS, B, E = x.shape
    H = n_heads
    Dh = E // H
    scale = 1.0 / math.sqrt(Dh)
    pe = positional_encoding(E, B)[None, :, :]                 # (1, B, E), batch-indexed

    def ln(v, g, b):
        mu = v.mean(-1, keepdims=True)
        var = ((v - mu) ** 2).mean(-1, keepdims=True)
        return (v - mu) / jnp.sqrt(var + _LN_EPS) * g + b

    def mha(q, k, v, p):                                        # seq-first (L, B, E)
        Lq, Lk = q.shape[0], k.shape[0]
        qp = q @ p["wq"].T + p["bq"]
        kp = k @ p["wk"].T + p["bk"]
        vp = v @ p["wv"].T + p["bv"]
        split = lambda t, L: t.reshape(L, B, H, Dh).transpose(1, 2, 0, 3)  # (B,H,L,Dh)
        qh, kh, vh = split(qp, Lq), split(kp, Lk), split(vp, Lk)
        s = jnp.einsum('bhld,bhsd->bhls', qh * scale, kh)
        a = jax.nn.softmax(s, axis=-1)
        o = jnp.einsum('bhls,bhsd->bhld', a, vh).transpose(2, 0, 1, 3).reshape(Lq, B, E)
        return o @ p["wo"].T + p["bo"]

    skip = x
    xa = ln(x, params["norm1_g"], params["norm1_b"]) if pre_norm else x
    qk = xa + pe
    x = skip + mha(qk, qk, xa, params["self_attn"])
    if pre_norm:
        skip = x
        xc = ln(x, params["norm2_g"], params["norm2_b"])
    else:
        x = ln(x, params["norm1_g"], params["norm1_b"]); skip = x; xc = x
    x = skip + mha(xc + dpos, encoder_out + epos, encoder_out, params["cross_attn"])
    if pre_norm:
        skip = x
        xf = ln(x, params["norm3_g"], params["norm3_b"])
    else:
        x = ln(x, params["norm2_g"], params["norm2_b"]); skip = x; xf = x
    h = jnp.maximum(xf @ params["w1"].T + params["b1"], 0.0)
    x = skip + (h @ params["w2"].T + params["b2"])
    if not pre_norm:
        x = ln(x, params["norm3_g"], params["norm3_b"])
    return x


# ---------------------------- parameter init (deterministic) ----------------------------

def _init_attn(key, E):
    ks = jax.random.split(key, 8)
    n = lambda k, s, sc=0.02: sc * jax.random.normal(k, s, jnp.float32)
    # wq/wk/wv correspond to torch's in_proj_weight split in (q, k, v) row order.
    return {
        "wq": n(ks[0], (E, E)), "bq": n(ks[1], (E,), 0.01),
        "wk": n(ks[2], (E, E)), "bk": n(ks[3], (E,), 0.01),
        "wv": n(ks[4], (E, E)), "bv": n(ks[5], (E,), 0.01),
        "wo": n(ks[6], (E, E)), "bo": n(ks[7], (E,), 0.01),
    }


def init_params(key, E, FF):
    ks = jax.random.split(key, 8)
    n = lambda k, s, sc=0.02: sc * jax.random.normal(k, s, jnp.float32)
    return {
        "self_attn": _init_attn(ks[0], E),
        "cross_attn": _init_attn(ks[1], E),
        "w1": n(ks[2], (FF, E)), "b1": n(ks[3], (FF,), 0.01),
        "w2": n(ks[4], (E, FF)), "b2": n(ks[5], (E,), 0.01),
        "norm1_g": jnp.ones((E,), jnp.float32), "norm1_b": jnp.zeros((E,), jnp.float32),
        "norm2_g": jnp.ones((E,), jnp.float32), "norm2_b": jnp.zeros((E,), jnp.float32),
        "norm3_g": jnp.ones((E,), jnp.float32), "norm3_b": jnp.zeros((E,), jnp.float32),
    }


if __name__ == "__main__":
    key = jax.random.PRNGKey(0)
    DS, ES, B, E, H, FF = 8, 10, 2, 32, 4, 64   # small config: dim_model=32, n_heads=4

    k0, k1, k2, k3, kparam = jax.random.split(key, 5)
    x = jax.random.normal(k0, (DS, B, E), jnp.float32)            # decoder tokens
    encoder_out = jax.random.normal(k1, (ES, B, E), jnp.float32)  # encoder features
    decoder_pos_embed = 0.1 * jax.random.normal(k2, (DS, 1, E), jnp.float32)
    encoder_pos_embed = 0.1 * jax.random.normal(k3, (ES, 1, E), jnp.float32)
    params = init_params(kparam, E, FF)

    out_post = act_decoder_layer(params, x, encoder_out,
                                 decoder_pos_embed, encoder_pos_embed,
                                 pre_norm=False, n_heads=H)
    out_pre = act_decoder_layer(params, x, encoder_out,
                                decoder_pos_embed, encoder_pos_embed,
                                pre_norm=True, n_heads=H)
    jax.block_until_ready(out_post)
    jax.block_until_ready(out_pre)

    ref_post = _ref_decoder_layer(params, x, encoder_out, decoder_pos_embed,
                                  encoder_pos_embed, False, H)
    ref_pre = _ref_decoder_layer(params, x, encoder_out, decoder_pos_embed,
                                 encoder_pos_embed, True, H)

    assert out_post.shape == (DS, B, E) and out_pre.shape == (DS, B, E)
    assert bool(jnp.all(jnp.isfinite(out_post))) and bool(jnp.all(jnp.isfinite(out_pre)))
    # bf16 MXU operands + approx reciprocal -> generous tolerance vs f32 reference.
    assert float(jnp.max(jnp.abs(out_post - ref_post))) < 7.5e-2
    assert float(jnp.max(jnp.abs(out_pre - ref_pre))) < 7.5e-2
    print("KERNEL_OK")
</pallas_src>

<mosaic_0001>
module attributes {stable_mosaic.version = 11 : i64} {
  func.func @_decoder_layer_kernel(%arg0: memref<2x8x32xf32, #tpu.memory_space<vmem>>, %arg1: memref<2x10x32xf32, #tpu.memory_space<vmem>>, %arg2: memref<2x1x32xf32, #tpu.memory_space<vmem>>, %arg3: memref<1x8x32xf32, #tpu.memory_space<vmem>>, %arg4: memref<1x10x32xf32, #tpu.memory_space<vmem>>, %arg5: memref<32x64xbf16, #tpu.memory_space<vmem>>, %arg6: memref<1x64xf32, #tpu.memory_space<vmem>>, %arg7: memref<32x32xbf16, #tpu.memory_space<vmem>>, %arg8: memref<1x32xf32, #tpu.memory_space<vmem>>, %arg9: memref<32x32xbf16, #tpu.memory_space<vmem>>, %arg10: memref<1x32xf32, #tpu.memory_space<vmem>>, %arg11: memref<32x32xbf16, #tpu.memory_space<vmem>>, %arg12: memref<1x32xf32, #tpu.memory_space<vmem>>, %arg13: memref<32x32xbf16, #tpu.memory_space<vmem>>, %arg14: memref<1x32xf32, #tpu.memory_space<vmem>>, %arg15: memref<32x32xbf16, #tpu.memory_space<vmem>>, %arg16: memref<1x32xf32, #tpu.memory_space<vmem>>, %arg17: memref<32x32xbf16, #tpu.memory_space<vmem>>, %arg18: memref<1x32xf32, #tpu.memory_space<vmem>>, %arg19: memref<32x64xbf16, #tpu.memory_space<vmem>>, %arg20: memref<1x64xf32, #tpu.memory_space<vmem>>, %arg21: memref<64x32xbf16, #tpu.memory_space<vmem>>, %arg22: memref<1x32xf32, #tpu.memory_space<vmem>>, %arg23: memref<1x32xf32, #tpu.memory_space<vmem>>, %arg24: memref<1x32xf32, #tpu.memory_space<vmem>>, %arg25: memref<1x32xf32, #tpu.memory_space<vmem>>, %arg26: memref<1x32xf32, #tpu.memory_space<vmem>>, %arg27: memref<1x32xf32, #tpu.memory_space<vmem>>, %arg28: memref<1x32xf32, #tpu.memory_space<vmem>>, %arg29: memref<2x8x32xf32, #tpu.memory_space<vmem>>) attributes {dimension_semantics = [], scalar_prefetch = 0 : i64, scratch_operands = 0 : i64, tpu.core_type = #tpu.core_type<tc>} {
    %c0 = arith.constant 0 : index
    %c0_0 = arith.constant 0 : index
    %c0_1 = arith.constant 0 : index
    %0 = vector.load %arg0[%c0, %c0_0, %c0_1] : memref<2x8x32xf32, #tpu.memory_space<vmem>>, vector<2x8x32xf32>
    %c0_2 = arith.constant 0 : index
    %c0_3 = arith.constant 0 : index
    %c0_4 = arith.constant 0 : index
    %1 = vector.load %arg1[%c0_2, %c0_3, %c0_4] : memref<2x10x32xf32, #tpu.memory_space<vmem>>, vector<2x10x32xf32>
    %c0_5 = arith.constant 0 : index
    %c0_6 = arith.constant 0 : index
    %c0_7 = arith.constant 0 : index
    %2 = vector.load %arg2[%c0_5, %c0_6, %c0_7] : memref<2x1x32xf32, #tpu.memory_space<vmem>>, vector<2x1x32xf32>
    %c0_8 = arith.constant 0 : index
    %c0_9 = arith.constant 0 : index
    %c0_10 = arith.constant 0 : index
    %3 = vector.load %arg3[%c0_8, %c0_9, %c0_10] : memref<1x8x32xf32, #tpu.memory_space<vmem>>, vector<1x8x32xf32>
    %c0_11 = arith.constant 0 : index
    %c0_12 = arith.constant 0 : index
    %c0_13 = arith.constant 0 : index
    %4 = vector.load %arg4[%c0_11, %c0_12, %c0_13] : memref<1x10x32xf32, #tpu.memory_space<vmem>>, vector<1x10x32xf32>
    %5 = vector.broadcast %2 : vector<2x1x32xf32> to vector<2x8x32xf32>
    %6 = arith.addf %0, %5 : vector<2x8x32xf32>
    %7 = vector.shape_cast %6 : vector<2x8x32xf32> to vector<16x32xf32>
    %8 = arith.truncf %7 : vector<16x32xf32> to vector<16x32xbf16>
    %c0_14 = arith.constant 0 : index
    %c0_15 = arith.constant 0 : index
    %9 = vector.load %arg5[%c0_14, %c0_15] : memref<32x64xbf16, #tpu.memory_space<vmem>>, vector<32x64xbf16>
    %cst = arith.constant dense<0.000000e+00> : vector<16x64xf32>
    %10 = tpu.matmul %8, %9, %cst {dimension_numbers = #tpu.dot_dimension_numbers<[1], [0], [0], [1], [0, 0, 1, 1], [], []>} : vector<16x32xbf16>, vector<32x64xbf16>, vector<16x64xf32> -> vector<16x64xf32>
    %c0_16 = arith.constant 0 : index
    %c0_17 = arith.constant 0 : index
    %11 = vector.load %arg6[%c0_16, %c0_17] : memref<1x64xf32, #tpu.memory_space<vmem>>, vector<1x64xf32>
    %12 = vector.broadcast %11 : vector<1x64xf32> to vector<16x64xf32>
    %13 = arith.addf %10, %12 : vector<16x64xf32>
    %14 = vector.extract_strided_slice %13 {offsets = [0, 0], sizes = [16, 32], strides = [1, 1]} : vector<16x64xf32> to vector<16x32xf32>
    %15 = vector.shape_cast %14 : vector<16x32xf32> to vector<2x8x32xf32>
    %16 = vector.extract_strided_slice %13 {offsets = [0, 32], sizes = [16, 32], strides = [1, 1]} : vector<16x64xf32> to vector<16x32xf32>
    %17 = vector.shape_cast %16 : vector<16x32xf32> to vector<2x8x32xf32>
    %18 = vector.shape_cast %0 : vector<2x8x32xf32> to vector<16x32xf32>
    %19 = arith.truncf %18 : vector<16x32xf32> to vector<16x32xbf16>
    %c0_18 = arith.constant 0 : index
    %c0_19 = arith.constant 0 : index
    %20 = vector.load %arg7[%c0_18, %c0_19] : memref<32x32xbf16, #tpu.memory_space<vmem>>, vector<32x32xbf16>
    %cst_20 = arith.constant dense<0.000000e+00> : vector<16x32xf32>
    %21 = tpu.matmul %19, %20, %cst_20 {dimension_numbers = #tpu.dot_dimension_numbers<[1], [0], [0], [1], [0, 0, 1, 1], [], []>} : vector<16x32xbf16>, vector<32x32xbf16>, vector<16x32xf32> -> vector<16x32xf32>
    %c0_21 = arith.constant 0 : index
    %c0_22 = arith.constant 0 : index
    %22 = vector.load %arg8[%c0_21, %c0_22] : memref<1x32xf32, #tpu.memory_space<vmem>>, vector<1x32xf32>
    %23 = vector.broadcast %22 : vector<1x32xf32> to vector<16x32xf32>
    %24 = arith.addf %21, %23 : vector<16x32xf32>
    %25 = vector.shape_cast %24 : vector<16x32xf32> to vector<2x8x32xf32>
    %26 = arith.truncf %15 : vector<2x8x32xf32> to vector<2x8x32xbf16>
    %27 = arith.truncf %17 : vector<2x8x32xf32> to vector<2x8x32xbf16>
    %28 = arith.truncf %25 : vector<2x8x32xf32> to vector<2x8x32xbf16>
    %29 = vector.extract_strided_slice %26 {offsets = [0, 0, 0], sizes = [2, 8, 8], strides = [1, 1, 1]} : vector<2x8x32xbf16> to vector<2x8x8xbf16>
    %30 = vector.extract_strided_slice %27 {offsets = [0, 0, 0], sizes = [2, 8, 8], strides = [1, 1, 1]} : vector<2x8x32xbf16> to vector<2x8x8xbf16>
    "tpu.trace_start"() <{level = 10 : i32, message = "bld,bsd->bls"}> : () -> ()
    %cst_23 = arith.constant dense<0.000000e+00> : vector<2x8x8xf32>
    %31 = tpu.matmul %29, %30, %cst_23 {dimension_numbers = #tpu.dot_dimension_numbers<[2], [2], [1], [1], [0, 0, 0, 1, 1, 1], [0], [0]>} : vector<2x8x8xbf16>, vector<2x8x8xbf16>, vector<2x8x8xf32> -> vector<2x8x8xf32>
    "tpu.trace_stop"() : () -> ()
    %cst_24 = arith.constant dense<0xFF800000> : vector<2x8xf32>
    %32 = vector.multi_reduction <maximumf>, %31, %cst_24 [2] : vector<2x8x8xf32> to vector<2x8xf32>
    %33 = vector.shape_cast %32 : vector<2x8xf32> to vector<2x8x1xf32>
    %34 = vector.broadcast %33 : vector<2x8x1xf32> to vector<2x8x8xf32>
    %35 = arith.subf %31, %34 : vector<2x8x8xf32>
    %36 = math.exp %35 : vector<2x8x8xf32>
    %cst_25 = arith.constant dense<0.000000e+00> : vector<2x8xf32>
    %37 = vector.multi_reduction <add>, %36, %cst_25 [2] : vector<2x8x8xf32> to vector<2x8xf32>
    %38 = vector.shape_cast %37 : vector<2x8xf32> to vector<2x8x1xf32>
    %39 = tpu.reciprocal %38 {approx = true} : vector<2x8x1xf32> -> vector<2x8x1xf32>
    %40 = vector.broadcast %39 : vector<2x8x1xf32> to vector<2x8x8xf32>
    %41 = arith.mulf %36, %40 : vector<2x8x8xf32>
    %42 = arith.truncf %41 : vector<2x8x8xf32> to vector<2x8x8xbf16>
    %43 = vector.extract_strided_slice %28 {offsets = [0, 0, 0], sizes = [2, 8, 8], strides = [1, 1, 1]} : vector<2x8x32xbf16> to vector<2x8x8xbf16>
    "tpu.trace_start"() <{level = 10 : i32, message = "bls,bsd->bld"}> : () -> ()
    %cst_26 = arith.constant dense<0.000000e+00> : vector<2x8x8xf32>
    %44 = tpu.matmul %42, %43, %cst_26 {dimension_numbers = #tpu.dot_dimension_numbers<[2], [1], [1], [2], [0, 0, 0, 1, 1, 2], [0], [0]>} : vector<2x8x8xbf16>, vector<2x8x8xbf16>, vector<2x8x8xf32> -> vector<2x8x8xf32>
    "tpu.trace_stop"() : () -> ()
    %45 = vector.extract_strided_slice %26 {offsets = [0, 0, 8], sizes = [2, 8, 8], strides = [1, 1, 1]} : vector<2x8x32xbf16> to vector<2x8x8xbf16>
    %46 = vector.extract_strided_slice %27 {offsets = [0, 0, 8], sizes = [2, 8, 8], strides = [1, 1, 1]} : vector<2x8x32xbf16> to vector<2x8x8xbf16>
    "tpu.trace_start"() <{level = 10 : i32, message = "bld,bsd->bls"}> : () -> ()
    %cst_27 = arith.constant dense<0.000000e+00> : vector<2x8x8xf32>
    %47 = tpu.matmul %45, %46, %cst_27 {dimension_numbers = #tpu.dot_dimension_numbers<[2], [2], [1], [1], [0, 0, 0, 1, 1, 1], [0], [0]>} : vector<2x8x8xbf16>, vector<2x8x8xbf16>, vector<2x8x8xf32> -> vector<2x8x8xf32>
    "tpu.trace_stop"() : () -> ()
    %cst_28 = arith.constant dense<0xFF800000> : vector<2x8xf32>
    %48 = vector.multi_reduction <maximumf>, %47, %cst_28 [2] : vector<2x8x8xf32> to vector<2x8xf32>
    %49 = vector.shape_cast %48 : vector<2x8xf32> to vector<2x8x1xf32>
    %50 = vector.broadcast %49 : vector<2x8x1xf32> to vector<2x8x8xf32>
    %51 = arith.subf %47, %50 : vector<2x8x8xf32>
    %52 = math.exp %51 : vector<2x8x8xf32>
    %cst_29 = arith.constant dense<0.000000e+00> : vector<2x8xf32>
    %53 = vector.multi_reduction <add>, %52, %cst_29 [2] : vector<2x8x8xf32> to vector<2x8xf32>
    %54 = vector.shape_cast %53 : vector<2x8xf32> to vector<2x8x1xf32>
    %55 = tpu.reciprocal %54 {approx = true} : vector<2x8x1xf32> -> vector<2x8x1xf32>
    %56 = vector.broadcast %55 : vector<2x8x1xf32> to vector<2x8x8xf32>
    %57 = arith.mulf %52, %56 : vector<2x8x8xf32>
    %58 = arith.truncf %57 : vector<2x8x8xf32> to vector<2x8x8xbf16>
    %59 = vector.extract_strided_slice %28 {offsets = [0, 0, 8], sizes = [2, 8, 8], strides = [1, 1, 1]} : vector<2x8x32xbf16> to vector<2x8x8xbf16>
    "tpu.trace_start"() <{level = 10 : i32, message = "bls,bsd->bld"}> : () -> ()
    %cst_30 = arith.constant dense<0.000000e+00> : vector<2x8x8xf32>
    %60 = tpu.matmul %58, %59, %cst_30 {dimension_numbers = #tpu.dot_dimension_numbers<[2], [1], [1], [2], [0, 0, 0, 1, 1, 2], [0], [0]>} : vector<2x8x8xbf16>, vector<2x8x8xbf16>, vector<2x8x8xf32> -> vector<2x8x8xf32>
    "tpu.trace_stop"() : () -> ()
    %61 = vector.extract_strided_slice %26 {offsets = [0, 0, 16], sizes = [2, 8, 8], strides = [1, 1, 1]} : vector<2x8x32xbf16> to vector<2x8x8xbf16>
    %62 = vector.extract_strided_slice %27 {offsets = [0, 0, 16], sizes = [2, 8, 8], strides = [1, 1, 1]} : vector<2x8x32xbf16> to vector<2x8x8xbf16>
    "tpu.trace_start"() <{level = 10 : i32, message = "bld,bsd->bls"}> : () -> ()
    %cst_31 = arith.constant dense<0.000000e+00> : vector<2x8x8xf32>
    %63 = tpu.matmul %61, %62, %cst_31 {dimension_numbers = #tpu.dot_dimension_numbers<[2], [2], [1], [1], [0, 0, 0, 1, 1, 1], [0], [0]>} : vector<2x8x8xbf16>, vector<2x8x8xbf16>, vector<2x8x8xf32> -> vector<2x8x8xf32>
    "tpu.trace_stop"() : () -> ()
    %cst_32 = arith.constant dense<0xFF800000> : vector<2x8xf32>
    %64 = vector.multi_reduction <maximumf>, %63, %cst_32 [2] : vector<2x8x8xf32> to vector<2x8xf32>
    %65 = vector.shape_cast %64 : vector<2x8xf32> to vector<2x8x1xf32>
    %66 = vector.broadcast %65 : vector<2x8x1xf32> to vector<2x8x8xf32>
    %67 = arith.subf %63, %66 : vector<2x8x8xf32>
    %68 = math.exp %67 : vector<2x8x8xf32>
    %cst_33 = arith.constant dense<0.000000e+00> : vector<2x8xf32>
    %69 = vector.multi_reduction <add>, %68, %cst_33 [2] : vector<2x8x8xf32> to vector<2x8xf32>
    %70 = vector.shape_cast %69 : vector<2x8xf32> to vector<2x8x1xf32>
    %71 = tpu.reciprocal %70 {approx = true} : vector<2x8x1xf32> -> vector<2x8x1xf32>
    %72 = vector.broadcast %71 : vector<2x8x1xf32> to vector<2x8x8xf32>
    %73 = arith.mulf %68, %72 : vector<2x8x8xf32>
    %74 = arith.truncf %73 : vector<2x8x8xf32> to vector<2x8x8xbf16>
    %75 = vector.extract_strided_slice %28 {offsets = [0, 0, 16], sizes = [2, 8, 8], strides = [1, 1, 1]} : vector<2x8x32xbf16> to vector<2x8x8xbf16>
    "tpu.trace_start"() <{level = 10 : i32, message = "bls,bsd->bld"}> : () -> ()
    %cst_34 = arith.constant dense<0.000000e+00> : vector<2x8x8xf32>
    %76 = tpu.matmul %74, %75, %cst_34 {dimension_numbers = #tpu.dot_dimension_numbers<[2], [1], [1], [2], [0, 0, 0, 1, 1, 2], [0], [0]>} : vector<2x8x8xbf16>, vector<2x8x8xbf16>, vector<2x8x8xf32> -> vector<2x8x8xf32>
    "tpu.trace_stop"() : () -> ()
    %77 = vector.extract_strided_slice %26 {offsets = [0, 0, 24], sizes = [2, 8, 8], strides = [1, 1, 1]} : vector<2x8x32xbf16> to vector<2x8x8xbf16>
    %78 = vector.extract_strided_slice %27 {offsets = [0, 0, 24], sizes = [2, 8, 8], strides = [1, 1, 1]} : vector<2x8x32xbf16> to vector<2x8x8xbf16>
    "tpu.trace_start"() <{level = 10 : i32, message = "bld,bsd->bls"}> : () -> ()
    %cst_35 = arith.constant dense<0.000000e+00> : vector<2x8x8xf32>
    %79 = tpu.matmul %77, %78, %cst_35 {dimension_numbers = #tpu.dot_dimension_numbers<[2], [2], [1], [1], [0, 0, 0, 1, 1, 1], [0], [0]>} : vector<2x8x8xbf16>, vector<2x8x8xbf16>, vector<2x8x8xf32> -> vector<2x8x8xf32>
    "tpu.trace_stop"() : () -> ()
    %cst_36 = arith.constant dense<0xFF800000> : vector<2x8xf32>
    %80 = vector.multi_reduction <maximumf>, %79, %cst_36 [2] : vector<2x8x8xf32> to vector<2x8xf32>
    %81 = vector.shape_cast %80 : vector<2x8xf32> to vector<2x8x1xf32>
    %82 = vector.broadcast %81 : vector<2x8x1xf32> to vector<2x8x8xf32>
    %83 = arith.subf %79, %82 : vector<2x8x8xf32>
    %84 = math.exp %83 : vector<2x8x8xf32>
    %cst_37 = arith.constant dense<0.000000e+00> : vector<2x8xf32>
    %85 = vector.multi_reduction <add>, %84, %cst_37 [2] : vector<2x8x8xf32> to vector<2x8xf32>
    %86 = vector.shape_cast %85 : vector<2x8xf32> to vector<2x8x1xf32>
    %87 = tpu.reciprocal %86 {approx = true} : vector<2x8x1xf32> -> vector<2x8x1xf32>
    %88 = vector.broadcast %87 : vector<2x8x1xf32> to vector<2x8x8xf32>
    %89 = arith.mulf %84, %88 : vector<2x8x8xf32>
    %90 = arith.truncf %89 : vector<2x8x8xf32> to vector<2x8x8xbf16>
    %91 = vector.extract_strided_slice %28 {offsets = [0, 0, 24], sizes = [2, 8, 8], strides = [1, 1, 1]} : vector<2x8x32xbf16> to vector<2x8x8xbf16>
    "tpu.trace_start"() <{level = 10 : i32, message = "bls,bsd->bld"}> : () -> ()
    %cst_38 = arith.constant dense<0.000000e+00> : vector<2x8x8xf32>
    %92 = tpu.matmul %90, %91, %cst_38 {dimension_numbers = #tpu.dot_dimension_numbers<[2], [1], [1], [2], [0, 0, 0, 1, 1, 2], [0], [0]>} : vector<2x8x8xbf16>, vector<2x8x8xbf16>, vector<2x8x8xf32> -> vector<2x8x8xf32>
    "tpu.trace_stop"() : () -> ()
    %93 = tpu.concatenate %44, %60, %76, %92 in 2 : vector<2x8x8xf32>, vector<2x8x8xf32>, vector<2x8x8xf32>, vector<2x8x8xf32> -> vector<2x8x32xf32>
    %94 = vector.shape_cast %93 : vector<2x8x32xf32> to vector<16x32xf32>
    %95 = arith.truncf %94 : vector<16x32xf32> to vector<16x32xbf16>
    %c0_39 = arith.constant 0 : index
    %c0_40 = arith.constant 0 : index
    %96 = vector.load %arg9[%c0_39, %c0_40] : memref<32x32xbf16, #tpu.memory_space<vmem>>, vector<32x32xbf16>
    %cst_41 = arith.constant dense<0.000000e+00> : vector<16x32xf32>
    %97 = tpu.matmul %95, %96, %cst_41 {dimension_numbers = #tpu.dot_dimension_numbers<[1], [0], [0], [1], [0, 0, 1, 1], [], []>} : vector<16x32xbf16>, vector<32x32xbf16>, vector<16x32xf32> -> vector<16x32xf32>
    %c0_42 = arith.constant 0 : index
    %c0_43 = arith.constant 0 : index
    %98 = vector.load %arg10[%c0_42, %c0_43] : memref<1x32xf32, #tpu.memory_space<vmem>>, vector<1x32xf32>
    %99 = vector.broadcast %98 : vector<1x32xf32> to vector<16x32xf32>
    %100 = arith.addf %97, %99 : vector<16x32xf32>
    %101 = vector.shape_cast %100 : vector<16x32xf32> to vector<2x8x32xf32>
    %102 = arith.addf %0, %101 : vector<2x8x32xf32>
    %cst_44 = arith.constant dense<0.000000e+00> : vector<2x8xf32>
    %103 = vector.multi_reduction <add>, %102, %cst_44 [2] : vector<2x8x32xf32> to vector<2x8xf32>
    %104 = vector.shape_cast %103 : vector<2x8xf32> to vector<2x8x1xf32>
    %cst_45 = arith.constant 3.200000e+01 : f32
    %105 = vector.broadcast %cst_45 : f32 to vector<2x8x1xf32>
    %106 = arith.divf %104, %105 : vector<2x8x1xf32>
    %107 = vector.broadcast %106 : vector<2x8x1xf32> to vector<2x8x32xf32>
    %108 = arith.subf %102, %107 : vector<2x8x32xf32>
    %109 = arith.mulf %108, %108 : vector<2x8x32xf32>
    %cst_46 = arith.constant dense<0.000000e+00> : vector<2x8xf32>
    %110 = vector.multi_reduction <add>, %109, %cst_46 [2] : vector<2x8x32xf32> to vector<2x8xf32>
    %111 = vector.shape_cast %110 : vector<2x8xf32> to vector<2x8x1xf32>
    %cst_47 = arith.constant 3.200000e+01 : f32
    %112 = vector.broadcast %cst_47 : f32 to vector<2x8x1xf32>
    %113 = arith.divf %111, %112 : vector<2x8x1xf32>
    %114 = vector.broadcast %106 : vector<2x8x1xf32> to vector<2x8x32xf32>
    %115 = arith.subf %102, %114 : vector<2x8x32xf32>
    %cst_48 = arith.constant 9.99999974E-6 : f32
    %116 = vector.broadcast %cst_48 : f32 to vector<2x8x1xf32>
    %117 = arith.addf %113, %116 : vector<2x8x1xf32>
    %118 = math.rsqrt %117 : vector<2x8x1xf32>
    %119 = vector.broadcast %118 : vector<2x8x1xf32> to vector<2x8x32xf32>
    %120 = arith.mulf %115, %119 : vector<2x8x32xf32>
    %c0_49 = arith.constant 0 : index
    %c0_50 = arith.constant 0 : index
    %121 = vector.load %arg23[%c0_49, %c0_50] : memref<1x32xf32, #tpu.memory_space<vmem>>, vector<1x32xf32>
    %122 = vector.shape_cast %121 : vector<1x32xf32> to vector<1x1x32xf32>
    %123 = vector.broadcast %122 : vector<1x1x32xf32> to vector<2x8x32xf32>
    %124 = arith.mulf %120, %123 : vector<2x8x32xf32>
    %c0_51 = arith.constant 0 : index
    %c0_52 = arith.constant 0 : index
    %125 = vector.load %arg24[%c0_51, %c0_52] : memref<1x32xf32, #tpu.memory_space<vmem>>, vector<1x32xf32>
    %126 = vector.shape_cast %125 : vector<1x32xf32> to vector<1x1x32xf32>
    %127 = vector.broadcast %126 : vector<1x1x32xf32> to vector<2x8x32xf32>
    %128 = arith.addf %124, %127 : vector<2x8x32xf32>
    %129 = vector.broadcast %3 : vector<1x8x32xf32> to vector<2x8x32xf32>
    %130 = arith.addf %128, %129 : vector<2x8x32xf32>
    %131 = vector.broadcast %4 : vector<1x10x32xf32> to vector<2x10x32xf32>
    %132 = arith.addf %1, %131 : vector<2x10x32xf32>
    %133 = vector.shape_cast %130 : vector<2x8x32xf32> to vector<16x32xf32>
    %134 = arith.truncf %133 : vector<16x32xf32> to vector<16x32xbf16>
    %c0_53 = arith.constant 0 : index
    %c0_54 = arith.constant 0 : index
    %135 = vector.load %arg11[%c0_53, %c0_54] : memref<32x32xbf16, #tpu.memory_space<vmem>>, vector<32x32xbf16>
    %cst_55 = arith.constant dense<0.000000e+00> : vector<16x32xf32>
    %136 = tpu.matmul %134, %135, %cst_55 {dimension_numbers = #tpu.dot_dimension_numbers<[1], [0], [0], [1], [0, 0, 1, 1], [], []>} : vector<16x32xbf16>, vector<32x32xbf16>, vector<16x32xf32> -> vector<16x32xf32>
    %c0_56 = arith.constant 0 : index
    %c0_57 = arith.constant 0 : index
    %137 = vector.load %arg12[%c0_56, %c0_57] : memref<1x32xf32, #tpu.memory_space<vmem>>, vector<1x32xf32>
    %138 = vector.broadcast %137 : vector<1x32xf32> to vector<16x32xf32>
    %139 = arith.addf %136, %138 : vector<16x32xf32>
    %140 = vector.shape_cast %139 : vector<16x32xf32> to vector<2x8x32xf32>
    %141 = vector.shape_cast %132 : vector<2x10x32xf32> to vector<20x32xf32>
    %142 = arith.truncf %141 : vector<20x32xf32> to vector<20x32xbf16>
    %c0_58 = arith.constant 0 : index
    %c0_59 = arith.constant 0 : index
    %143 = vector.load %arg13[%c0_58, %c0_59] : memref<32x32xbf16, #tpu.memory_space<vmem>>, vector<32x32xbf16>
    %cst_60 = arith.constant dense<0.000000e+00> : vector<20x32xf32>
    %144 = tpu.matmul %142, %143, %cst_60 {dimension_numbers = #tpu.dot_dimension_numbers<[1], [0], [0], [1], [0, 0, 1, 1], [], []>} : vector<20x32xbf16>, vector<32x32xbf16>, vector<20x32xf32> -> vector<20x32xf32>
    %c0_61 = arith.constant 0 : index
    %c0_62 = arith.constant 0 : index
    %145 = vector.load %arg14[%c0_61, %c0_62] : memref<1x32xf32, #tpu.memory_space<vmem>>, vector<1x32xf32>
    %146 = vector.broadcast %145 : vector<1x32xf32> to vector<20x32xf32>
    %147 = arith.addf %144, %146 : vector<20x32xf32>
    %148 = vector.shape_cast %147 : vector<20x32xf32> to vector<2x10x32xf32>
    %149 = vector.shape_cast %1 : vector<2x10x32xf32> to vector<20x32xf32>
    %150 = arith.truncf %149 : vector<20x32xf32> to vector<20x32xbf16>
    %c0_63 = arith.constant 0 : index
    %c0_64 = arith.constant 0 : index
    %151 = vector.load %arg15[%c0_63, %c0_64] : memref<32x32xbf16, #tpu.memory_space<vmem>>, vector<32x32xbf16>
    %cst_65 = arith.constant dense<0.000000e+00> : vector<20x32xf32>
    %152 = tpu.matmul %150, %151, %cst_65 {dimension_numbers = #tpu.dot_dimension_numbers<[1], [0], [0], [1], [0, 0, 1, 1], [], []>} : vector<20x32xbf16>, vector<32x32xbf16>, vector<20x32xf32> -> vector<20x32xf32>
    %c0_66 = arith.constant 0 : index
    %c0_67 = arith.constant 0 : index
    %153 = vector.load %arg16[%c0_66, %c0_67] : memref<1x32xf32, #tpu.memory_space<vmem>>, vector<1x32xf32>
    %154 = vector.broadcast %153 : vector<1x32xf32> to vector<20x32xf32>
    %155 = arith.addf %152, %154 : vector<20x32xf32>
    %156 = vector.shape_cast %155 : vector<20x32xf32> to vector<2x10x32xf32>
    %157 = arith.truncf %140 : vector<2x8x32xf32> to vector<2x8x32xbf16>
    %158 = arith.truncf %148 : vector<2x10x32xf32> to vector<2x10x32xbf16>
    %159 = arith.truncf %156 : vector<2x10x32xf32> to vector<2x10x32xbf16>
    %160 = vector.extract_strided_slice %157 {offsets = [0, 0, 0], sizes = [2, 8, 8], strides = [1, 1, 1]} : vector<2x8x32xbf16> to vector<2x8x8xbf16>
    %161 = vector.extract_strided_slice %158 {offsets = [0, 0, 0], sizes = [2, 10, 8], strides = [1, 1, 1]} : vector<2x10x32xbf16> to vector<2x10x8xbf16>
    "tpu.trace_start"() <{level = 10 : i32, message = "bld,bsd->bls"}> : () -> ()
    %cst_68 = arith.constant dense<0.000000e+00> : vector<2x8x10xf32>
    %162 = tpu.matmul %160, %161, %cst_68 {dimension_numbers = #tpu.dot_dimension_numbers<[2], [2], [1], [1], [0, 0, 0, 1, 1, 1], [0], [0]>} : vector<2x8x8xbf16>, vector<2x10x8xbf16>, vector<2x8x10xf32> -> vector<2x8x10xf32>
    "tpu.trace_stop"() : () -> ()
    %cst_69 = arith.constant dense<0xFF800000> : vector<2x8xf32>
    %163 = vector.multi_reduction <maximumf>, %162, %cst_69 [2] : vector<2x8x10xf32> to vector<2x8xf32>
    %164 = vector.shape_cast %163 : vector<2x8xf32> to vector<2x8x1xf32>
    %165 = vector.broadcast %164 : vector<2x8x1xf32> to vector<2x8x10xf32>
    %166 = arith.subf %162, %165 : vector<2x8x10xf32>
    %167 = math.exp %166 : vector<2x8x10xf32>
    %cst_70 = arith.constant dense<0.000000e+00> : vector<2x8xf32>
    %168 = vector.multi_reduction <add>, %167, %cst_70 [2] : vector<2x8x10xf32> to vector<2x8xf32>
    %169 = vector.shape_cast %168 : vector<2x8xf32> to vector<2x8x1xf32>
    %170 = tpu.reciprocal %169 {approx = true} : vector<2x8x1xf32> -> vector<2x8x1xf32>
    %171 = vector.broadcast %170 : vector<2x8x1xf32> to vector<2x8x10xf32>
    %172 = arith.mulf %167, %171 : vector<2x8x10xf32>
    %173 = arith.truncf %172 : vector<2x8x10xf32> to vector<2x8x10xbf16>
    %174 = vector.extract_strided_slice %159 {offsets = [0, 0, 0], sizes = [2, 10, 8], strides = [1, 1, 1]} : vector<2x10x32xbf16> to vector<2x10x8xbf16>
    "tpu.trace_start"() <{level = 10 : i32, message = "bls,bsd->bld"}> : () -> ()
    %cst_71 = arith.constant dense<0.000000e+00> : vector<2x8x8xf32>
    %175 = tpu.matmul %173, %174, %cst_71 {dimension_numbers = #tpu.dot_dimension_numbers<[2], [1], [1], [2], [0, 0, 0, 1, 1, 2], [0], [0]>} : vector<2x8x10xbf16>, vector<2x10x8xbf16>, vector<2x8x8xf32> -> vector<2x8x8xf32>
    "tpu.trace_stop"() : () -> ()
    %176 = vector.extract_strided_slice %157 {offsets = [0, 0, 8], sizes = [2, 8, 8], strides = [1, 1, 1]} : vector<2x8x32xbf16> to vector<2x8x8xbf16>
    %177 = vector.extract_strided_slice %158 {offsets = [0, 0, 8], sizes = [2, 10, 8], strides = [1, 1, 1]} : vector<2x10x32xbf16> to vector<2x10x8xbf16>
    "tpu.trace_start"() <{level = 10 : i32, message = "bld,bsd->bls"}> : () -> ()
    %cst_72 = arith.constant dense<0.000000e+00> : vector<2x8x10xf32>
    %178 = tpu.matmul %176, %177, %cst_72 {dimension_numbers = #tpu.dot_dimension_numbers<[2], [2], [1], [1], [0, 0, 0, 1, 1, 1], [0], [0]>} : vector<2x8x8xbf16>, vector<2x10x8xbf16>, vector<2x8x10xf32> -> vector<2x8x10xf32>
    "tpu.trace_stop"() : () -> ()
    %cst_73 = arith.constant dense<0xFF800000> : vector<2x8xf32>
    %179 = vector.multi_reduction <maximumf>, %178, %cst_73 [2] : vector<2x8x10xf32> to vector<2x8xf32>
    %180 = vector.shape_cast %179 : vector<2x8xf32> to vector<2x8x1xf32>
    %181 = vector.broadcast %180 : vector<2x8x1xf32> to vector<2x8x10xf32>
    %182 = arith.subf %178, %181 : vector<2x8x10xf32>
    %183 = math.exp %182 : vector<2x8x10xf32>
    %cst_74 = arith.constant dense<0.000000e+00> : vector<2x8xf32>
    %184 = vector.multi_reduction <add>, %183, %cst_74 [2] : vector<2x8x10xf32> to vector<2x8xf32>
    %185 = vector.shape_cast %184 : vector<2x8xf32> to vector<2x8x1xf32>
    %186 = tpu.reciprocal %185 {approx = true} : vector<2x8x1xf32> -> vector<2x8x1xf32>
    %187 = vector.broadcast %186 : vector<2x8x1xf32> to vector<2x8x10xf32>
    %188 = arith.mulf %183, %187 : vector<2x8x10xf32>
    %189 = arith.truncf %188 : vector<2x8x10xf32> to vector<2x8x10xbf16>
    %190 = vector.extract_strided_slice %159 {offsets = [0, 0, 8], sizes = [2, 10, 8], strides = [1, 1, 1]} : vector<2x10x32xbf16> to vector<2x10x8xbf16>
    "tpu.trace_start"() <{level = 10 : i32, message = "bls,bsd->bld"}> : () -> ()
    %cst_75 = arith.constant dense<0.000000e+00> : vector<2x8x8xf32>
    %191 = tpu.matmul %189, %190, %cst_75 {dimension_numbers = #tpu.dot_dimension_numbers<[2], [1], [1], [2], [0, 0, 0, 1, 1, 2], [0], [0]>} : vector<2x8x10xbf16>, vector<2x10x8xbf16>, vector<2x8x8xf32> -> vector<2x8x8xf32>
    "tpu.trace_stop"() : () -> ()
    %192 = vector.extract_strided_slice %157 {offsets = [0, 0, 16], sizes = [2, 8, 8], strides = [1, 1, 1]} : vector<2x8x32xbf16> to vector<2x8x8xbf16>
    %193 = vector.extract_strided_slice %158 {offsets = [0, 0, 16], sizes = [2, 10, 8], strides = [1, 1, 1]} : vector<2x10x32xbf16> to vector<2x10x8xbf16>
    "tpu.trace_start"() <{level = 10 : i32, message = "bld,bsd->bls"}> : () -> ()
    %cst_76 = arith.constant dense<0.000000e+00> : vector<2x8x10xf32>
    %194 = tpu.matmul %192, %193, %cst_76 {dimension_numbers = #tpu.dot_dimension_numbers<[2], [2], [1], [1], [0, 0, 0, 1, 1, 1], [0], [0]>} : vector<2x8x8xbf16>, vector<2x10x8xbf16>, vector<2x8x10xf32> -> vector<2x8x10xf32>
    "tpu.trace_stop"() : () -> ()
    %cst_77 = arith.constant dense<0xFF800000> : vector<2x8xf32>
    %195 = vector.multi_reduction <maximumf>, %194, %cst_77 [2] : vector<2x8x10xf32> to vector<2x8xf32>
    %196 = vector.shape_cast %195 : vector<2x8xf32> to vector<2x8x1xf32>
    %197 = vector.broadcast %196 : vector<2x8x1xf32> to vector<2x8x10xf32>
    %198 = arith.subf %194, %197 : vector<2x8x10xf32>
    %199 = math.exp %198 : vector<2x8x10xf32>
    %cst_78 = arith.constant dense<0.000000e+00> : vector<2x8xf32>
    %200 = vector.multi_reduction <add>, %199, %cst_78 [2] : vector<2x8x10xf32> to vector<2x8xf32>
    %201 = vector.shape_cast %200 : vector<2x8xf32> to vector<2x8x1xf32>
    %202 = tpu.reciprocal %201 {approx = true} : vector<2x8x1xf32> -> vector<2x8x1xf32>
    %203 = vector.broadcast %202 : vector<2x8x1xf32> to vector<2x8x10xf32>
    %204 = arith.mulf %199, %203 : vector<2x8x10xf32>
    %205 = arith.truncf %204 : vector<2x8x10xf32> to vector<2x8x10xbf16>
    %206 = vector.extract_strided_slice %159 {offsets = [0, 0, 16], sizes = [2, 10, 8], strides = [1, 1, 1]} : vector<2x10x32xbf16> to vector<2x10x8xbf16>
    "tpu.trace_start"() <{level = 10 : i32, message = "bls,bsd->bld"}> : () -> ()
    %cst_79 = arith.constant dense<0.000000e+00> : vector<2x8x8xf32>
    %207 = tpu.matmul %205, %206, %cst_79 {dimension_numbers = #tpu.dot_dimension_numbers<[2], [1], [1], [2], [0, 0, 0, 1, 1, 2], [0], [0]>} : vector<2x8x10xbf16>, vector<2x10x8xbf16>, vector<2x8x8xf32> -> vector<2x8x8xf32>
    "tpu.trace_stop"() : () -> ()
    %208 = vector.extract_strided_slice %157 {offsets = [0, 0, 24], sizes = [2, 8, 8], strides = [1, 1, 1]} : vector<2x8x32xbf16> to vector<2x8x8xbf16>
    %209 = vector.extract_strided_slice %158 {offsets = [0, 0, 24], sizes = [2, 10, 8], strides = [1, 1, 1]} : vector<2x10x32xbf16> to vector<2x10x8xbf16>
    "tpu.trace_start"() <{level = 10 : i32, message = "bld,bsd->bls"}> : () -> ()
    %cst_80 = arith.constant dense<0.000000e+00> : vector<2x8x10xf32>
    %210 = tpu.matmul %208, %209, %cst_80 {dimension_numbers = #tpu.dot_dimension_numbers<[2], [2], [1], [1], [0, 0, 0, 1, 1, 1], [0], [0]>} : vector<2x8x8xbf16>, vector<2x10x8xbf16>, vector<2x8x10xf32> -> vector<2x8x10xf32>
    "tpu.trace_stop"() : () -> ()
    %cst_81 = arith.constant dense<0xFF800000> : vector<2x8xf32>
    %211 = vector.multi_reduction <maximumf>, %210, %cst_81 [2] : vector<2x8x10xf32> to vector<2x8xf32>
    %212 = vector.shape_cast %211 : vector<2x8xf32> to vector<2x8x1xf32>
    %213 = vector.broadcast %212 : vector<2x8x1xf32> to vector<2x8x10xf32>
    %214 = arith.subf %210, %213 : vector<2x8x10xf32>
    %215 = math.exp %214 : vector<2x8x10xf32>
    %cst_82 = arith.constant dense<0.000000e+00> : vector<2x8xf32>
    %216 = vector.multi_reduction <add>, %215, %cst_82 [2] : vector<2x8x10xf32> to vector<2x8xf32>
    %217 = vector.shape_cast %216 : vector<2x8xf32> to vector<2x8x1xf32>
    %218 = tpu.reciprocal %217 {approx = true} : vector<2x8x1xf32> -> vector<2x8x1xf32>
    %219 = vector.broadcast %218 : vector<2x8x1xf32> to vector<2x8x10xf32>
    %220 = arith.mulf %215, %219 : vector<2x8x10xf32>
    %221 = arith.truncf %220 : vector<2x8x10xf32> to vector<2x8x10xbf16>
    %222 = vector.extract_strided_slice %159 {offsets = [0, 0, 24], sizes = [2, 10, 8], strides = [1, 1, 1]} : vector<2x10x32xbf16> to vector<2x10x8xbf16>
    "tpu.trace_start"() <{level = 10 : i32, message = "bls,bsd->bld"}> : () -> ()
    %cst_83 = arith.constant dense<0.000000e+00> : vector<2x8x8xf32>
    %223 = tpu.matmul %221, %222, %cst_83 {dimension_numbers = #tpu.dot_dimension_numbers<[2], [1], [1], [2], [0, 0, 0, 1, 1, 2], [0], [0]>} : vector<2x8x10xbf16>, vector<2x10x8xbf16>, vector<2x8x8xf32> -> vector<2x8x8xf32>
    "tpu.trace_stop"() : () -> ()
    %224 = tpu.concatenate %175, %191, %207, %223 in 2 : vector<2x8x8xf32>, vector<2x8x8xf32>, vector<2x8x8xf32>, vector<2x8x8xf32> -> vector<2x8x32xf32>
    %225 = vector.shape_cast %224 : vector<2x8x32xf32> to vector<16x32xf32>
    %226 = arith.truncf %225 : vector<16x32xf32> to vector<16x32xbf16>
    %c0_84 = arith.constant 0 : index
    %c0_85 = arith.constant 0 : index
    %227 = vector.load %arg17[%c0_84, %c0_85] : memref<32x32xbf16, #tpu.memory_space<vmem>>, vector<32x32xbf16>
    %cst_86 = arith.constant dense<0.000000e+00> : vector<16x32xf32>
    %228 = tpu.matmul %226, %227, %cst_86 {dimension_numbers = #tpu.dot_dimension_numbers<[1], [0], [0], [1], [0, 0, 1, 1], [], []>} : vector<16x32xbf16>, vector<32x32xbf16>, vector<16x32xf32> -> vector<16x32xf32>
    %c0_87 = arith.constant 0 : index
    %c0_88 = arith.constant 0 : index
    %229 = vector.load %arg18[%c0_87, %c0_88] : memref<1x32xf32, #tpu.memory_space<vmem>>, vector<1x32xf32>
    %230 = vector.broadcast %229 : vector<1x32xf32> to vector<16x32xf32>
    %231 = arith.addf %228, %230 : vector<16x32xf32>
    %232 = vector.shape_cast %231 : vector<16x32xf32> to vector<2x8x32xf32>
    %233 = arith.addf %128, %232 : vector<2x8x32xf32>
    %cst_89 = arith.constant dense<0.000000e+00> : vector<2x8xf32>
    %234 = vector.multi_reduction <add>, %233, %cst_89 [2] : vector<2x8x32xf32> to vector<2x8xf32>
    %235 = vector.shape_cast %234 : vector<2x8xf32> to vector<2x8x1xf32>
    %cst_90 = arith.constant 3.200000e+01 : f32
    %236 = vector.broadcast %cst_90 : f32 to vector<2x8x1xf32>
    %237 = arith.divf %235, %236 : vector<2x8x1xf32>
    %238 = vector.broadcast %237 : vector<2x8x1xf32> to vector<2x8x32xf32>
    %239 = arith.subf %233, %238 : vector<2x8x32xf32>
    %240 = arith.mulf %239, %239 : vector<2x8x32xf32>
    %cst_91 = arith.constant dense<0.000000e+00> : vector<2x8xf32>
    %241 = vector.multi_reduction <add>, %240, %cst_91 [2] : vector<2x8x32xf32> to vector<2x8xf32>
    %242 = vector.shape_cast %241 : vector<2x8xf32> to vector<2x8x1xf32>
    %cst_92 = arith.constant 3.200000e+01 : f32
    %243 = vector.broadcast %cst_92 : f32 to vector<2x8x1xf32>
    %244 = arith.divf %242, %243 : vector<2x8x1xf32>
    %245 = vector.broadcast %237 : vector<2x8x1xf32> to vector<2x8x32xf32>
    %246 = arith.subf %233, %245 : vector<2x8x32xf32>
    %cst_93 = arith.constant 9.99999974E-6 : f32
    %247 = vector.broadcast %cst_93 : f32 to vector<2x8x1xf32>
    %248 = arith.addf %244, %247 : vector<2x8x1xf32>
    %249 = math.rsqrt %248 : vector<2x8x1xf32>
    %250 = vector.broadcast %249 : vector<2x8x1xf32> to vector<2x8x32xf32>
    %251 = arith.mulf %246, %250 : vector<2x8x32xf32>
    %c0_94 = arith.constant 0 : index
    %c0_95 = arith.constant 0 : index
    %252 = vector.load %arg25[%c0_94, %c0_95] : memref<1x32xf32, #tpu.memory_space<vmem>>, vector<1x32xf32>
    %253 = vector.shape_cast %252 : vector<1x32xf32> to vector<1x1x32xf32>
    %254 = vector.broadcast %253 : vector<1x1x32xf32> to vector<2x8x32xf32>
    %255 = arith.mulf %251, %254 : vector<2x8x32xf32>
    %c0_96 = arith.constant 0 : index
    %c0_97 = arith.constant 0 : index
    %256 = vector.load %arg26[%c0_96, %c0_97] : memref<1x32xf32, #tpu.memory_space<vmem>>, vector<1x32xf32>
    %257 = vector.shape_cast %256 : vector<1x32xf32> to vector<1x1x32xf32>
    %258 = vector.broadcast %257 : vector<1x1x32xf32> to vector<2x8x32xf32>
    %259 = arith.addf %255, %258 : vector<2x8x32xf32>
    %260 = vector.shape_cast %259 : vector<2x8x32xf32> to vector<16x32xf32>
    %261 = arith.truncf %260 : vector<16x32xf32> to vector<16x32xbf16>
    %c0_98 = arith.constant 0 : index
    %c0_99 = arith.constant 0 : index
    %262 = vector.load %arg19[%c0_98, %c0_99] : memref<32x64xbf16, #tpu.memory_space<vmem>>, vector<32x64xbf16>
    %cst_100 = arith.constant dense<0.000000e+00> : vector<16x64xf32>
    %263 = tpu.matmul %261, %262, %cst_100 {dimension_numbers = #tpu.dot_dimension_numbers<[1], [0], [0], [1], [0, 0, 1, 1], [], []>} : vector<16x32xbf16>, vector<32x64xbf16>, vector<16x64xf32> -> vector<16x64xf32>
    %c0_101 = arith.constant 0 : index
    %c0_102 = arith.constant 0 : index
    %264 = vector.load %arg20[%c0_101, %c0_102] : memref<1x64xf32, #tpu.memory_space<vmem>>, vector<1x64xf32>
    %265 = vector.broadcast %264 : vector<1x64xf32> to vector<16x64xf32>
    %266 = arith.addf %263, %265 : vector<16x64xf32>
    %cst_103 = arith.constant 0.000000e+00 : f32
    %267 = vector.broadcast %cst_103 : f32 to vector<16x64xf32>
    %268 = arith.maximumf %266, %267 : vector<16x64xf32>
    %269 = arith.truncf %268 : vector<16x64xf32> to vector<16x64xbf16>
    %c0_104 = arith.constant 0 : index
    %c0_105 = arith.constant 0 : index
    %270 = vector.load %arg21[%c0_104, %c0_105] : memref<64x32xbf16, #tpu.memory_space<vmem>>, vector<64x32xbf16>
    %cst_106 = arith.constant dense<0.000000e+00> : vector<16x32xf32>
    %271 = tpu.matmul %269, %270, %cst_106 {dimension_numbers = #tpu.dot_dimension_numbers<[1], [0], [0], [1], [0, 0, 1, 1], [], []>} : vector<16x64xbf16>, vector<64x32xbf16>, vector<16x32xf32> -> vector<16x32xf32>
    %c0_107 = arith.constant 0 : index
    %c0_108 = arith.constant 0 : index
    %272 = vector.load %arg22[%c0_107, %c0_108] : memref<1x32xf32, #tpu.memory_space<vmem>>, vector<1x32xf32>
    %273 = vector.broadcast %272 : vector<1x32xf32> to vector<16x32xf32>
    %274 = arith.addf %271, %273 : vector<16x32xf32>
    %275 = vector.shape_cast %274 : vector<16x32xf32> to vector<2x8x32xf32>
    %276 = arith.addf %259, %275 : vector<2x8x32xf32>
    %cst_109 = arith.constant dense<0.000000e+00> : vector<2x8xf32>
    %277 = vector.multi_reduction <add>, %276, %cst_109 [2] : vector<2x8x32xf32> to vector<2x8xf32>
    %278 = vector.shape_cast %277 : vector<2x8xf32> to vector<2x8x1xf32>
    %cst_110 = arith.constant 3.200000e+01 : f32
    %279 = vector.broadcast %cst_110 : f32 to vector<2x8x1xf32>
    %280 = arith.divf %278, %279 : vector<2x8x1xf32>
    %281 = vector.broadcast %280 : vector<2x8x1xf32> to vector<2x8x32xf32>
    %282 = arith.subf %276, %281 : vector<2x8x32xf32>
    %283 = arith.mulf %282, %282 : vector<2x8x32xf32>
    %cst_111 = arith.constant dense<0.000000e+00> : vector<2x8xf32>
    %284 = vector.multi_reduction <add>, %283, %cst_111 [2] : vector<2x8x32xf32> to vector<2x8xf32>
    %285 = vector.shape_cast %284 : vector<2x8xf32> to vector<2x8x1xf32>
    %cst_112 = arith.constant 3.200000e+01 : f32
    %286 = vector.broadcast %cst_112 : f32 to vector<2x8x1xf32>
    %287 = arith.divf %285, %286 : vector<2x8x1xf32>
    %288 = vector.broadcast %280 : vector<2x8x1xf32> to vector<2x8x32xf32>
    %289 = arith.subf %276, %288 : vector<2x8x32xf32>
    %cst_113 = arith.constant 9.99999974E-6 : f32
    %290 = vector.broadcast %cst_113 : f32 to vector<2x8x1xf32>
    %291 = arith.addf %287, %290 : vector<2x8x1xf32>
    %292 = math.rsqrt %291 : vector<2x8x1xf32>
    %293 = vector.broadcast %292 : vector<2x8x1xf32> to vector<2x8x32xf32>
    %294 = arith.mulf %289, %293 : vector<2x8x32xf32>
    %c0_114 = arith.constant 0 : index
    %c0_115 = arith.constant 0 : index
    %295 = vector.load %arg27[%c0_114, %c0_115] : memref<1x32xf32, #tpu.memory_space<vmem>>, vector<1x32xf32>
    %296 = vector.shape_cast %295 : vector<1x32xf32> to vector<1x1x32xf32>
    %297 = vector.broadcast %296 : vector<1x1x32xf32> to vector<2x8x32xf32>
    %298 = arith.mulf %294, %297 : vector<2x8x32xf32>
    %c0_116 = arith.constant 0 : index
    %c0_117 = arith.constant 0 : index
    %299 = vector.load %arg28[%c0_116, %c0_117] : memref<1x32xf32, #tpu.memory_space<vmem>>, vector<1x32xf32>
    %300 = vector.shape_cast %299 : vector<1x32xf32> to vector<1x1x32xf32>
    %301 = vector.broadcast %300 : vector<1x1x32xf32> to vector<2x8x32xf32>
    %302 = arith.addf %298, %301 : vector<2x8x32xf32>
    %c0_118 = arith.constant 0 : index
    %c0_119 = arith.constant 0 : index
    %c0_120 = arith.constant 0 : index
    %303 = vector.load %arg29[%c0_118, %c0_119, %c0_120] : memref<2x8x32xf32, #tpu.memory_space<vmem>>, vector<2x8x32xf32>
    tpu.vector_store %arg29[%c0_118, %c0_119, %c0_120], %302 {strides = array<i32>} : memref<2x8x32xf32, #tpu.memory_space<vmem>>, vector<2x8x32xf32>,
    return
  }
}

</mosaic_0001>

<llo_original>
// kernel: tpu_custom_call.1
$region0: #{tpu_custom_call.1}
  #allocation0 [shape = 'u32[]', space=smem, size = 0x4, offset = 0x4, fixed_abs, tag = 'smem constant byte address 0x4 - core index']
  #allocation1 [shape = 'u32[72,128]{1,0:T(1,128)}', space=vmem, size = 0x9000, scoped, tag = 'internal scratch']
  %s0 = inlined_call_operand.smem [shape: u32[30], index: -1, kind: input, shape index: {}]
  %s1 = sld [smem:[%s0]]
  %s2 = scalar_lea.smem %s0, 1
  %s3 = sld [smem:[%s2]]
  %s4 = scalar_lea.smem %s0, 2
  %s5 = sld [smem:[%s4]]
  %s6 = scalar_lea.smem %s0, 3
  %s7 = sld [smem:[%s6]]
  %s8 = scalar_lea.smem %s0, 4
  %s9 = sld [smem:[%s8]]
  %s10 = scalar_lea.smem %s0, 5
  %s11 = sld [smem:[%s10]]
  %s12 = scalar_lea.smem %s0, 6
  %s13 = sld [smem:[%s12]]
  %s14 = scalar_lea.smem %s0, 7
  %s15 = sld [smem:[%s14]]
  %s16 = scalar_lea.smem %s0, 8
  %s17 = sld [smem:[%s16]]
  %s18 = scalar_lea.smem %s0, 9
  %s19 = sld [smem:[%s18]]
  %s20 = scalar_lea.smem %s0, 10
  %s21 = sld [smem:[%s20]]
  %s22 = scalar_lea.smem %s0, 11
  %s23 = sld [smem:[%s22]]
  %s24 = scalar_lea.smem %s0, 12
  %s25 = sld [smem:[%s24]]
  %s26 = scalar_lea.smem %s0, 13
  %s27 = sld [smem:[%s26]]
  %s28 = scalar_lea.smem %s0, 14
  %s29 = sld [smem:[%s28]]
  %s30 = scalar_lea.smem %s0, 15
  %s31 = sld [smem:[%s30]]
  %s32 = scalar_lea.smem %s0, 16
  %s33 = sld [smem:[%s32]]
  %s34 = scalar_lea.smem %s0, 17
  %s35 = sld [smem:[%s34]]
  %s36 = scalar_lea.smem %s0, 18
  %s37 = sld [smem:[%s36]]
  %s38 = scalar_lea.smem %s0, 19
  %s39 = sld [smem:[%s38]]
  %s40 = scalar_lea.smem %s0, 20
  %s41 = sld [smem:[%s40]]
  %s42 = scalar_lea.smem %s0, 21
  %s43 = sld [smem:[%s42]]
  %s44 = scalar_lea.smem %s0, 22
  %s45 = sld [smem:[%s44]]
  %s46 = scalar_lea.smem %s0, 23
  %s47 = sld [smem:[%s46]]
  %s48 = scalar_lea.smem %s0, 24
  %s49 = sld [smem:[%s48]]
  %s50 = scalar_lea.smem %s0, 25
  %s51 = sld [smem:[%s50]]
  %s52 = scalar_lea.smem %s0, 26
  %s53 = sld [smem:[%s52]]
  %s54 = scalar_lea.smem %s0, 27
  %s55 = sld [smem:[%s54]]
  %s56 = scalar_lea.smem %s0, 28
  %s57 = sld [smem:[%s56]]
  %s58 = scalar_lea.smem %s0, 29
  %s59 = sld [smem:[%s58]]
  %s60 = sld [smem:[#allocation0]]
  $region146: #{tpu_custom_call.1} parent=0
    _
  %s62 = ssub.s32 1, %s60
  %s63 = scalar_select 0, %s62, %s60
  $region1: #{tpu_custom_call.1} parent=0
    #allocation2 [shape = 'u8[4096]{0}', space=vmem, size = 0x1000, scoped, tag = 'input window, operand 3, single buffered']
    #allocation3 [shape = 's32[1]{0}', space=sflag, size = 0x4, scoped, tag = 'scoped memory for tpu_custom_call.1']
    #allocation4 [shape = 's32[1]{0}', space=sflag, size = 0x4, scoped, tag = 'scoped memory for tpu_custom_call.1']
    #allocation5 [shape = 'u8[512]{0}', space=vmem, size = 0x400, scoped, tag = 'input window, operand 12, single buffered']
    #allocation6 [shape = 's32[1]{0}', space=sflag, size = 0x4, scoped, tag = 'scoped memory for tpu_custom_call.1']
    #allocation7 [shape = 'u8[8192]{0}', space=vmem, size = 0x2000, scoped, tag = 'input window, operand 15, single buffered']
    #allocation8 [shape = 'u8[8192]{0}', space=vmem, size = 0x2000, scoped, tag = 'input window, operand 17, single buffered']
    #allocation9 [shape = 's32[1]{0}', space=sflag, size = 0x4, scoped, tag = 'scoped memory for tpu_custom_call.1']
    #allocation10 [shape = 'u8[8192]{0}', space=vmem, size = 0x2000, scoped, tag = 'input window, operand 19, single buffered']
    #allocation11 [shape = 'u8[8192]{0}', space=vmem, size = 0x2000, scoped, tag = 'output window, operand 0, single buffered']
    %64 = vsyncpa [#allocation3], 0
    %65 = vsyncpa [#allocation6], 0
    %66 = vsyncpa [#allocation9], 0
    %67 = vsyncpa [#allocation4], 0
    // Predicated region
    $region2: #{tpu_custom_call.1} parent=1 // pred_check
      _
    $region3: #{tpu_custom_call.1} parent=1 // pred_check_branch
      %69 = sbr.rel (0) target = $region5
    $region4: #{tpu_custom_call.1} parent=1 // pred_region
      _
    $region5: #{tpu_custom_call.1} parent=1 // pred_fallthru
      _
    // Predicated region
    $region6: #{tpu_custom_call.1} parent=1 // pred_check
      _
    $region7: #{tpu_custom_call.1} parent=1 // pred_check_branch
      %71 = sbr.rel (0) target = $region9
    $region8: #{tpu_custom_call.1} parent=1 // pred_region
      _
    $region9: #{tpu_custom_call.1} parent=1 // pred_fallthru
      _
    // Predicated region
    $region10: #{tpu_custom_call.1} parent=1 // pred_check
      _
    $region11: #{tpu_custom_call.1} parent=1 // pred_check_branch
      %73 = sbr.rel (0) target = $region13
    $region12: #{tpu_custom_call.1} parent=1 // pred_region
      _
    $region13: #{tpu_custom_call.1} parent=1 // pred_fallthru
      _
    // Predicated region
    $region14: #{tpu_custom_call.1} parent=1 // pred_check
      _
    $region15: #{tpu_custom_call.1} parent=1 // pred_check_branch
      %75 = sbr.rel (0) target = $region17
    $region16: #{tpu_custom_call.1} parent=1 // pred_region
      %77 = vsyncadd [#allocation3], 0
      %s79 = sshll.u32 %s7, 4
      %s80 = int_to_ptr.hbm [resolvable:$true] %s79
      %s81 = sshll.u32 [#allocation2], 4
      %s82 = int_to_ptr.vmem [resolvable:$true] %s81
      %84 = dma.hbm_to_vmem [thread:$0]  %s80, 128, %s82, [#allocation3]
    $region17: #{tpu_custom_call.1} parent=1 // pred_fallthru
      _
    // Predicated region
    $region18: #{tpu_custom_call.1} parent=1 // pred_check
      _
    $region19: #{tpu_custom_call.1} parent=1 // pred_check_branch
      %86 = sbr.rel (0) target = $region21
    $region20: #{tpu_custom_call.1} parent=1 // pred_region
      _
    $region21: #{tpu_custom_call.1} parent=1 // pred_fallthru
      _
    // Predicated region
    $region22: #{tpu_custom_call.1} parent=1 // pred_check
      _
    $region23: #{tpu_custom_call.1} parent=1 // pred_check_branch
      %88 = sbr.rel (0) target = $region25
    $region24: #{tpu_custom_call.1} parent=1 // pred_region
      _
    $region25: #{tpu_custom_call.1} parent=1 // pred_fallthru
      _
    // Predicated region
    $region26: #{tpu_custom_call.1} parent=1 // pred_check
      _
    $region27: #{tpu_custom_call.1} parent=1 // pred_check_branch
      %90 = sbr.rel (0) target = $region29
    $region28: #{tpu_custom_call.1} parent=1 // pred_region
      _
    $region29: #{tpu_custom_call.1} parent=1 // pred_fallthru
      _
    // Predicated region
    $region30: #{tpu_custom_call.1} parent=1 // pred_check
      _
    $region31: #{tpu_custom_call.1} parent=1 // pred_check_branch
      %92 = sbr.rel (0) target = $region33
    $region32: #{tpu_custom_call.1} parent=1 // pred_region
      _
    $region33: #{tpu_custom_call.1} parent=1 // pred_fallthru
      _
    // Predicated region
    $region34: #{tpu_custom_call.1} parent=1 // pred_check
      _
    $region35: #{tpu_custom_call.1} parent=1 // pred_check_branch
      %94 = sbr.rel (0) target = $region37
    $region36: #{tpu_custom_call.1} parent=1 // pred_region
      _
    $region37: #{tpu_custom_call.1} parent=1 // pred_fallthru
      _
    // Predicated region
    $region38: #{tpu_custom_call.1} parent=1 // pred_check
      _
    $region39: #{tpu_custom_call.1} parent=1 // pred_check_branch
      %96 = sbr.rel (0) target = $region41
    $region40: #{tpu_custom_call.1} parent=1 // pred_region
      _
    $region41: #{tpu_custom_call.1} parent=1 // pred_fallthru
      _
    // Predicated region
    $region42: #{tpu_custom_call.1} parent=1 // pred_check
      _
    $region43: #{tpu_custom_call.1} parent=1 // pred_check_branch
      %98 = sbr.rel (0) target = $region45
    $region44: #{tpu_custom_call.1} parent=1 // pred_region
      _
    $region45: #{tpu_custom_call.1} parent=1 // pred_fallthru
      _
    // Predicated region
    $region46: #{tpu_custom_call.1} parent=1 // pred_check
      _
    $region47: #{tpu_custom_call.1} parent=1 // pred_check_branch
      %100 = sbr.rel (0) target = $region49
    $region48: #{tpu_custom_call.1} parent=1 // pred_region
      _
    $region49: #{tpu_custom_call.1} parent=1 // pred_fallthru
      _
    // Predicated region
    $region50: #{tpu_custom_call.1} parent=1 // pred_check
      _
    $region51: #{tpu_custom_call.1} parent=1 // pred_check_branch
      %102 = sbr.rel (0) target = $region53
    $region52: #{tpu_custom_call.1} parent=1 // pred_region
      %104 = vsyncadd [#allocation6], 0
      %s106 = sshll.u32 %s25, 4
      %s107 = int_to_ptr.hbm [resolvable:$true] %s106
      %s108 = sshll.u32 [#allocation5], 4
      %s109 = int_to_ptr.vmem [resolvable:$true] %s108
      %111 = dma.hbm_to_vmem [thread:$0]  %s107, 16, %s109, [#allocation6]
    $region53: #{tpu_custom_call.1} parent=1 // pred_fallthru
      _
    // Predicated region
    $region54: #{tpu_custom_call.1} parent=1 // pred_check
      _
    $region55: #{tpu_custom_call.1} parent=1 // pred_check_branch
      %113 = sbr.rel (0) target = $region57
    $region56: #{tpu_custom_call.1} parent=1 // pred_region
      _
    $region57: #{tpu_custom_call.1} parent=1 // pred_fallthru
      _
    // Predicated region
    $region58: #{tpu_custom_call.1} parent=1 // pred_check
      _
    $region59: #{tpu_custom_call.1} parent=1 // pred_check_branch
      %115 = sbr.rel (0) target = $region61
    $region60: #{tpu_custom_call.1} parent=1 // pred_region
      _
    $region61: #{tpu_custom_call.1} parent=1 // pred_fallthru
      _
    // Predicated region
    $region62: #{tpu_custom_call.1} parent=1 // pred_check
      _
    $region63: #{tpu_custom_call.1} parent=1 // pred_check_branch
      %117 = sbr.rel (0) target = $region65
    $region64: #{tpu_custom_call.1} parent=1 // pred_region
      %119 = vsyncadd [#allocation6], 0
      %s120 = sshll.u32 %s31, 4
      %s121 = int_to_ptr.hbm [resolvable:$true] %s120
      %s122 = sshll.u32 [#allocation7], 4
      %s123 = int_to_ptr.vmem [resolvable:$true] %s122
      %128 = dma.hbm_to_vmem [thread:$0]  %s121, 256, %s123, [#allocation6], 64, 64, 4
    $region65: #{tpu_custom_call.1} parent=1 // pred_fallthru
      _
    // Predicated region
    $region66: #{tpu_custom_call.1} parent=1 // pred_check
      _
    $region67: #{tpu_custom_call.1} parent=1 // pred_check_branch
      %130 = sbr.rel (0) target = $region69
    $region68: #{tpu_custom_call.1} parent=1 // pred_region
      _
    $region69: #{tpu_custom_call.1} parent=1 // pred_fallthru
      _
    // Predicated region
    $region70: #{tpu_custom_call.1} parent=1 // pred_check
      _
    $region71: #{tpu_custom_call.1} parent=1 // pred_check_branch
      %132 = sbr.rel (0) target = $region73
    $region72: #{tpu_custom_call.1} parent=1 // pred_region
      %134 = vsyncadd [#allocation9], 0
      %s135 = sshll.u32 %s35, 4
      %s136 = int_to_ptr.hbm [resolvable:$true] %s135
      %s137 = sshll.u32 [#allocation8], 4
      %s138 = int_to_ptr.vmem [resolvable:$true] %s137
      %143 = dma.hbm_to_vmem [thread:$0]  %s136, 256, %s138, [#allocation9], 64, 64, 4
    $region73: #{tpu_custom_call.1} parent=1 // pred_fallthru
      _
    // Predicated region
    $region74: #{tpu_custom_call.1} parent=1 // pred_check
      _
    $region75: #{tpu_custom_call.1} parent=1 // pred_check_branch
      %145 = sbr.rel (0) target = $region77
    $region76: #{tpu_custom_call.1} parent=1 // pred_region
      _
    $region77: #{tpu_custom_call.1} parent=1 // pred_fallthru
      _
    // Predicated region
    $region78: #{tpu_custom_call.1} parent=1 // pred_check
      _
    $region79: #{tpu_custom_call.1} parent=1 // pred_check_branch
      %147 = sbr.rel (0) target = $region81
    $region80: #{tpu_custom_call.1} parent=1 // pred_region
      %149 = vsyncadd [#allocation9], 0
      %s150 = sshll.u32 %s39, 4
      %s151 = int_to_ptr.hbm [resolvable:$true] %s150
      %s152 = sshll.u32 [#allocation10], 4
      %s153 = int_to_ptr.vmem [resolvable:$true] %s152
      %158 = dma.hbm_to_vmem [thread:$0]  %s151, 256, %s153, [#allocation9], 64, 64, 4
    $region81: #{tpu_custom_call.1} parent=1 // pred_fallthru
      _
    // Predicated region
    $region82: #{tpu_custom_call.1} parent=1 // pred_check
      _
    $region83: #{tpu_custom_call.1} parent=1 // pred_check_branch
      %160 = sbr.rel (0) target = $region85
    $region84: #{tpu_custom_call.1} parent=1 // pred_region
      _
    $region85: #{tpu_custom_call.1} parent=1 // pred_fallthru
      _
    // Predicated region
    $region86: #{tpu_custom_call.1} parent=1 // pred_check
      _
    $region87: #{tpu_custom_call.1} parent=1 // pred_check_branch
      %162 = sbr.rel (0) target = $region89
    $region88: #{tpu_custom_call.1} parent=1 // pred_region
      _
    $region89: #{tpu_custom_call.1} parent=1 // pred_fallthru
      _
    // Predicated region
    $region90: #{tpu_custom_call.1} parent=1 // pred_check
      _
    $region91: #{tpu_custom_call.1} parent=1 // pred_check_branch
      %164 = sbr.rel (0) target = $region93
    $region92: #{tpu_custom_call.1} parent=1 // pred_region
      _
    $region93: #{tpu_custom_call.1} parent=1 // pred_fallthru
      _
    // Predicated region
    $region94: #{tpu_custom_call.1} parent=1 // pred_check
      _
    $region95: #{tpu_custom_call.1} parent=1 // pred_check_branch
      %166 = sbr.rel (0) target = $region97
    $region96: #{tpu_custom_call.1} parent=1 // pred_region
      _
    $region97: #{tpu_custom_call.1} parent=1 // pred_fallthru
      _
    // Predicated region
    $region98: #{tpu_custom_call.1} parent=1 // pred_check
      _
    $region99: #{tpu_custom_call.1} parent=1 // pred_check_branch
      %168 = sbr.rel (0) target = $region101
    $region100: #{tpu_custom_call.1} parent=1 // pred_region
      _
    $region101: #{tpu_custom_call.1} parent=1 // pred_fallthru
      _
    // Predicated region
    $region102: #{tpu_custom_call.1} parent=1 // pred_check
      _
    $region103: #{tpu_custom_call.1} parent=1 // pred_check_branch
      %170 = sbr.rel (0) target = $region105
    $region104: #{tpu_custom_call.1} parent=1 // pred_region
      _
    $region105: #{tpu_custom_call.1} parent=1 // pred_fallthru
      _
    // Predicated region
    $region106: #{tpu_custom_call.1} parent=1 // pred_check
      _
    $region107: #{tpu_custom_call.1} parent=1 // pred_check_branch
      %172 = sbr.rel (0) target = $region109
    $region108: #{tpu_custom_call.1} parent=1 // pred_region
      _
    $region109: #{tpu_custom_call.1} parent=1 // pred_fallthru
      _
    // Predicated region
    $region110: #{tpu_custom_call.1} parent=1 // pred_check
      _
    $region111: #{tpu_custom_call.1} parent=1 // pred_check_branch
      %174 = sbr.rel (0) target = $region113
    $region112: #{tpu_custom_call.1} parent=1 // pred_region
      _
    $region113: #{tpu_custom_call.1} parent=1 // pred_fallthru
      _
    // Predicated region
    $region114: #{tpu_custom_call.1} parent=1 // pred_check
      _
    $region115: #{tpu_custom_call.1} parent=1 // pred_check_branch
      %176 = sbr.rel (0) target = $region117
    $region116: #{tpu_custom_call.1} parent=1 // pred_region
      _
    $region117: #{tpu_custom_call.1} parent=1 // pred_fallthru
      _
    // Predicated region
    $region118: #{tpu_custom_call.1} parent=1 // pred_check
      _
    $region119: #{tpu_custom_call.1} parent=1 // pred_check_branch
      %178 = sbr.rel (0) target = $region121
    $region120: #{tpu_custom_call.1} parent=1 // pred_region
      %180 = dma.done [#allocation3], 128
    $region121: #{tpu_custom_call.1} parent=1 // pred_fallthru
      _
    // Predicated region
    $region122: #{tpu_custom_call.1} parent=1 // pred_check
      _
    $region123: #{tpu_custom_call.1} parent=1 // pred_check_branch
      %182 = sbr.rel (0) target = $region125
    $region124: #{tpu_custom_call.1} parent=1 // pred_region
      %184 = dma.done [#allocation6], 16
    $region125: #{tpu_custom_call.1} parent=1 // pred_fallthru
      _
    // Predicated region
    $region126: #{tpu_custom_call.1} parent=1 // pred_check
      _
    $region127: #{tpu_custom_call.1} parent=1 // pred_check_branch
      %186 = sbr.rel (0) target = $region129
    $region128: #{tpu_custom_call.1} parent=1 // pred_region
      %188 = dma.done [#allocation6], 256
    $region129: #{tpu_custom_call.1} parent=1 // pred_fallthru
      _
    // Predicated region
    $region130: #{tpu_custom_call.1} parent=1 // pred_check
      _
    $region131: #{tpu_custom_call.1} parent=1 // pred_check_branch
      %190 = sbr.rel (0) target = $region133
    $region132: #{tpu_custom_call.1} parent=1 // pred_region
      %192 = dma.done [#allocation9], 256
    $region133: #{tpu_custom_call.1} parent=1 // pred_fallthru
      _
    // Predicated region
    $region134: #{tpu_custom_call.1} parent=1 // pred_check
      _
    $region135: #{tpu_custom_call.1} parent=1 // pred_check_branch
      %194 = sbr.rel (0) target = $region137
    $region136: #{tpu_custom_call.1} parent=1 // pred_region
      %196 = dma.done [#allocation9], 256
    $region137: #{tpu_custom_call.1} parent=1 // pred_fallthru
      _
    %v198 = vld [vmem:[%s1] sm:$0xff]
    %v199 = vld [vmem:[%s1 + $0x8] sm:$0xff]
    %v200 = vld [vmem:[%s3] sm:$0xff]
    %v201 = vld [vmem:[%s3 + $0x8] sm:$0x3]
    %v202 = vld [vmem:[%s3 + $0x10] sm:$0xff]
    %v203 = vld [vmem:[%s3 + $0x18] sm:$0x3]
    %v204 = vld [vmem:[%s5] sm:$0x1]
    %v205 = vld [vmem:[%s5 + $0x1] sm:$0x1]
    %v206 = vld [vmem:[#allocation2] sm:$0xff]
    %v207 = vld [vmem:[%s9] sm:$0xff]
    %v208 = vld [vmem:[%s9 + $0x8] sm:$0x3]
    %v211 = vperm.slane %v204, 0
    %v212 = vperm.slane %v205, 0
    %v215 = vadd.f32 %v198, %v211
    %v216 = vadd.f32 %v199, %v212
    %v217 = vpack.c.bf16 %v216, %v215
    %v218 = vld [vmem:[%s11] sm:$0xf]
    %v219 = vld [vmem:[%s11 + $0x4] sm:$0xf]
    %v220 = vld [vmem:[%s11 + $0x8] sm:$0xf]
    %v221 = vld [vmem:[%s11 + $0xc] sm:$0xf]
    %v222 = vld [vmem:[%s13] sm:$0x1]
    %v224 = vperm.slane %v222, 0
    %v230 = vunpack.c.l.b16 %v218
    %v231 = vunpack.c.l.b16 %v219
    %v232 = vunpack.c.l.b16 %v220
    %v233 = vunpack.c.l.b16 %v221
    %v234 = vpack.c.b16 %v231, %v230
    %v235 = vpack.c.b16 %v233, %v232
    %vm238 = vcmask 261120
    %v240 = vsel %vm238, %v217, 0
    %242 = vmatpush.bf16.msra.mxu0 0
    %243 = vmatpush.bf16.msra.mxu0 0
    %244 = vmatpush.bf16.msra.mxu0 0
    %245 = vmatpush.bf16.msra.mxu0 0
    %246 = vmatpush.bf16.msra.mxu0 0
    %247 = vmatpush.bf16.msra.mxu0 0
    %248 = vmatpush.bf16.msra.mxu0 %v235
    %249 = vmatpush.bf16.msra.mxu0 %v234
    %250 = vmatmul.bf16.gmra.mxu0 %v240
    %v251 = vpop.f32.mrf.mxu0
    %v252 = vadd.f32 %v224, %v251
    %v253 = vpop.f32.mrf.mxu0
    %v254 = vadd.f32 %v224, %v253
    %255 = vdwg.mxu0
    %v256 = vpack.c.bf16 %v199, %v198
    %v257 = vld [vmem:[%s15] sm:$0xf]
    %v258 = vld [vmem:[%s15 + $0x4] sm:$0xf]
    %v259 = vld [vmem:[%s15 + $0x8] sm:$0xf]
    %v260 = vld [vmem:[%s15 + $0xc] sm:$0xf]
    %v261 = vld [vmem:[%s17] sm:$0x1]
    %v263 = vperm.slane %v261, 0
    %v269 = vunpack.c.l.b16 %v257
    %v270 = vunpack.c.l.b16 %v258
    %v271 = vunpack.c.l.b16 %v259
    %v272 = vunpack.c.l.b16 %v260
    %v273 = vpack.c.b16 %v270, %v269
    %v274 = vpack.c.b16 %v272, %v271
    %v278 = vsel %vm238, %v256, 0
    %280 = vmatpush.bf16.msra.mxu0 0
    %281 = vmatpush.bf16.msra.mxu0 0
    %282 = vmatpush.bf16.msra.mxu0 0
    %283 = vmatpush.bf16.msra.mxu0 0
    %284 = vmatpush.bf16.msra.mxu0 0
    %285 = vmatpush.bf16.msra.mxu0 0
    %286 = vmatpush.bf16.msra.mxu0 %v274
    %287 = vmatpush.bf16.msra.mxu0 %v273
    %288 = vmatmul.bf16.gmra.mxu0 %v278
    %v289 = vpop.f32.mrf.mxu0
    %v290 = vadd.f32 %v263, %v289
    %v291 = vpop.f32.mrf.mxu0
    %v292 = vadd.f32 %v263, %v291
    %293 = vdwg.mxu0
    %v294 = vpack.c.bf16 %v252, %v252
    %v295 = vpack.c.bf16 %v254, %v254
    %v296 = vpack.c.bf16 %v290, %v290
    %v297 = vpack.c.bf16 %v292, %v292
    %v299 = vunpack.c.l.b16 %v294
    %v300 = vpack.c.b16 %v299, %v299
    %301 = vrot.lane.b32.xlu0 %v300, 96
    %v302 = vpop.permute.xlu0 %301
    %vm303 = vcmask 64512
    %v305 = vsel %vm303, %v294, 0
    %v308 = vsel %vm303, %v302, 0
    %310 = vmatpush.bf16.xpose.msra.mxu0 0
    %311 = vmatpush.bf16.xpose.msra.mxu0 0
    %312 = vmatpush.bf16.xpose.msra.mxu0 0
    %313 = vmatpush.bf16.xpose.msra.mxu0 0
    %314 = vmatpush.bf16.xpose.msra.mxu0 0
    %315 = vmatpush.bf16.xpose.msra.mxu0 0
    %316 = vmatpush.bf16.xpose.msra.mxu0 0
    %317 = vmatpush.bf16.xpose.msra.mxu0 %v308
    %318 = vmatmul.bf16.gmra.mxu0 %v305
    %v319 = vpop.f32.mrf.mxu0
    %v320 = vadd.f32 0.0, %v319
    %v321 = vpop.f32.mrf.mxu0
    %322 = vdwg.mxu0
    %v324 = vunpack.c.l.b16 %v295
    %v325 = vpack.c.b16 %v324, %v324
    %326 = vrot.lane.b32.xlu0 %v325, 96
    %v327 = vpop.permute.xlu0 %326
    %v329 = vsel %vm303, %v295, 0
    %v332 = vsel %vm303, %v327, 0
    %334 = vmatpush.bf16.xpose.msra.mxu0 0
    %335 = vmatpush.bf16.xpose.msra.mxu0 0
    %336 = vmatpush.bf16.xpose.msra.mxu0 0
    %337 = vmatpush.bf16.xpose.msra.mxu0 0
    %338 = vmatpush.bf16.xpose.msra.mxu0 0
    %339 = vmatpush.bf16.xpose.msra.mxu0 0
    %340 = vmatpush.bf16.xpose.msra.mxu0 0
    %341 = vmatpush.bf16.xpose.msra.mxu0 %v332
    %342 = vmatmul.bf16.gmra.mxu0 %v329
    %v343 = vpop.f32.mrf.mxu0
    %v344 = vadd.f32 0.0, %v343
    %v345 = vpop.f32.mrf.mxu0
    %346 = vdwg.mxu0
    %v347 = vsel %vm303, %v320, -inf
    %348 = vmax.xlane.f32.xlu0 %v347
    %v349 = vpop.xlane.xlu0 %348
    %v350 = vsel %vm303, %v344, -inf
    %351 = vmax.xlane.f32.xlu0 %v350
    %v352 = vpop.xlane.xlu0 %351
    %v353 = vsub.f32 %v320, %v349
    %v354 = vsub.f32 %v344, %v352
    %v355 = vmul.f32 %v353, 1.442695
    %v356 = vpow.pop %v355
    %v357 = vmul.f32 %v354, 1.442695
    %v358 = vpow.pop %v357
    %v359 = vsel %vm303, %v356, 0.0
    %360 = vadd.xlane.f32.xlu0 %v359
    %v361 = vpop.xlane.xlu0 %360
    %v362 = vsel %vm303, %v358, 0.0
    %363 = vadd.xlane.f32.xlu0 %v362
    %v364 = vpop.xlane.xlu0 %363
    %v365 = vrcp.pop %v361
    %v366 = vrcp.pop %v364
    %v367 = vmul.f32 %v356, %v365
    %v368 = vmul.f32 %v358, %v366
    %v369 = vpack.c.bf16 %v367, %v367
    %v370 = vpack.c.bf16 %v368, %v368
    %v372 = vsel %vm303, %v369, 0
    %vm374 = vcmask 1043456
    %v376 = vsel %vm374, %v296, 0
    %378 = vmatpush.bf16.msra.mxu0 0
    %379 = vmatpush.bf16.msra.mxu0 0
    %380 = vmatpush.bf16.msra.mxu0 0
    %381 = vmatpush.bf16.msra.mxu0 0
    %382 = vmatpush.bf16.msra.mxu0 0
    %383 = vmatpush.bf16.msra.mxu0 0
    %384 = vmatpush.bf16.msra.mxu0 0
    %385 = vmatpush.bf16.msra.mxu0 %v376
    %386 = vmatmul.bf16.gmra.mxu0 %v372
    %v387 = vpop.f32.mrf.mxu0
    %v388 = vadd.f32 0.0, %v387
    %v389 = vpop.f32.mrf.mxu0
    %390 = vdwg.mxu0
    %v392 = vsel %vm303, %v370, 0
    %v395 = vsel %vm374, %v297, 0
    %397 = vmatpush.bf16.msra.mxu0 0
    %398 = vmatpush.bf16.msra.mxu0 0
    %399 = vmatpush.bf16.msra.mxu0 0
    %400 = vmatpush.bf16.msra.mxu0 0
    %401 = vmatpush.bf16.msra.mxu0 0
    %402 = vmatpush.bf16.msra.mxu0 0
    %403 = vmatpush.bf16.msra.mxu0 0
    %404 = vmatpush.bf16.msra.mxu0 %v395
    %405 = vmatmul.bf16.gmra.mxu0 %v392
    %v406 = vpop.f32.mrf.mxu0
    %v407 = vadd.f32 0.0, %v406
    %v408 = vpop.f32.mrf.mxu0
    %409 = vdwg.mxu0
    %410 = vrot.lane.b32.xlu0 %v300, 120
    %v411 = vpop.permute.xlu0 %410
    %412 = vrot.lane.b32.xlu0 %v300, 88
    %v413 = vpop.permute.xlu0 %412
    %v415 = vsel %vm303, %v411, 0
    %v418 = vsel %vm303, %v413, 0
    %420 = vmatpush.bf16.xpose.msra.mxu0 0
    %421 = vmatpush.bf16.xpose.msra.mxu0 0
    %422 = vmatpush.bf16.xpose.msra.mxu0 0
    %423 = vmatpush.bf16.xpose.msra.mxu0 0
    %424 = vmatpush.bf16.xpose.msra.mxu0 0
    %425 = vmatpush.bf16.xpose.msra.mxu0 0
    %426 = vmatpush.bf16.xpose.msra.mxu0 0
    %427 = vmatpush.bf16.xpose.msra.mxu0 %v418
    %428 = vmatmul.bf16.gmra.mxu0 %v415
    %v429 = vpop.f32.mrf.mxu0
    %v430 = vadd.f32 0.0, %v429
    %v431 = vpop.f32.mrf.mxu0
    %432 = vdwg.mxu0
    %433 = vrot.lane.b32.xlu0 %v325, 120
    %v434 = vpop.permute.xlu0 %433
    %435 = vrot.lane.b32.xlu0 %v325, 88
    %v436 = vpop.permute.xlu0 %435
    %v438 = vsel %vm303, %v434, 0
    %v441 = vsel %vm303, %v436, 0
    %443 = vmatpush.bf16.xpose.msra.mxu0 0
    %444 = vmatpush.bf16.xpose.msra.mxu0 0
    %445 = vmatpush.bf16.xpose.msra.mxu0 0
    %446 = vmatpush.bf16.xpose.msra.mxu0 0
    %447 = vmatpush.bf16.xpose.msra.mxu0 0
    %448 = vmatpush.bf16.xpose.msra.mxu0 0
    %449 = vmatpush.bf16.xpose.msra.mxu0 0
    %450 = vmatpush.bf16.xpose.msra.mxu0 %v441
    %451 = vmatmul.bf16.gmra.mxu0 %v438
    %v452 = vpop.f32.mrf.mxu0
    %v453 = vadd.f32 0.0, %v452
    %v454 = vpop.f32.mrf.mxu0
    %455 = vdwg.mxu0
    %v456 = vsel %vm303, %v430, -inf
    %457 = vmax.xlane.f32.xlu0 %v456
    %v458 = vpop.xlane.xlu0 %457
    %v459 = vsel %vm303, %v453, -inf
    %460 = vmax.xlane.f32.xlu0 %v459
    %v461 = vpop.xlane.xlu0 %460
    %v462 = vsub.f32 %v430, %v458
    %v463 = vsub.f32 %v453, %v461
    %v464 = vmul.f32 %v462, 1.442695
    %v465 = vpow.pop %v464
    %v466 = vmul.f32 %v463, 1.442695
    %v467 = vpow.pop %v466
    %v468 = vsel %vm303, %v465, 0.0
    %469 = vadd.xlane.f32.xlu0 %v468
    %v470 = vpop.xlane.xlu0 %469
    %v471 = vsel %vm303, %v467, 0.0
    %472 = vadd.xlane.f32.xlu0 %v471
    %v473 = vpop.xlane.xlu0 %472
    %v474 = vrcp.pop %v470
    %v475 = vrcp.pop %v473
    %v476 = vmul.f32 %v465, %v474
    %v477 = vmul.f32 %v467, %v475
    %v478 = vpack.c.bf16 %v476, %v476
    %v479 = vpack.c.bf16 %v477, %v477
    %v481 = vunpack.c.l.b16 %v296
    %v482 = vpack.c.b16 %v481, %v481
    %483 = vrot.lane.b32.xlu0 %v482, 120
    %v484 = vpop.permute.xlu0 %483
    %v486 = vsel %vm303, %v478, 0
    %v489 = vsel %vm374, %v484, 0
    %491 = vmatpush.bf16.msra.mxu0 0
    %492 = vmatpush.bf16.msra.mxu0 0
    %493 = vmatpush.bf16.msra.mxu0 0
    %494 = vmatpush.bf16.msra.mxu0 0
    %495 = vmatpush.bf16.msra.mxu0 0
    %496 = vmatpush.bf16.msra.mxu0 0
    %497 = vmatpush.bf16.msra.mxu0 0
    %498 = vmatpush.bf16.msra.mxu0 %v489
    %499 = vmatmul.bf16.gmra.mxu0 %v486
    %v500 = vpop.f32.mrf.mxu0
    %v501 = vadd.f32 0.0, %v500
    %v502 = vpop.f32.mrf.mxu0
    %503 = vdwg.mxu0
    %v505 = vunpack.c.l.b16 %v297
    %v506 = vpack.c.b16 %v505, %v505
    %507 = vrot.lane.b32.xlu0 %v506, 120
    %v508 = vpop.permute.xlu0 %507
    %v510 = vsel %vm303, %v479, 0
    %v513 = vsel %vm374, %v508, 0
    %515 = vmatpush.bf16.msra.mxu0 0
    %516 = vmatpush.bf16.msra.mxu0 0
    %517 = vmatpush.bf16.msra.mxu0 0
    %518 = vmatpush.bf16.msra.mxu0 0
    %519 = vmatpush.bf16.msra.mxu0 0
    %520 = vmatpush.bf16.msra.mxu0 0
    %521 = vmatpush.bf16.msra.mxu0 0
    %522 = vmatpush.bf16.msra.mxu0 %v513
    %523 = vmatmul.bf16.gmra.mxu0 %v510
    %v524 = vpop.f32.mrf.mxu0
    %v525 = vadd.f32 0.0, %v524
    %v526 = vpop.f32.mrf.mxu0
    %527 = vdwg.mxu0
    %528 = vrot.lane.b32.xlu0 %v300, 112
    %v529 = vpop.permute.xlu0 %528
    %530 = vrot.lane.b32.xlu0 %v300, 80
    %v531 = vpop.permute.xlu0 %530
    %v533 = vsel %vm303, %v529, 0
    %v536 = vsel %vm303, %v531, 0
    %538 = vmatpush.bf16.xpose.msra.mxu0 0
    %539 = vmatpush.bf16.xpose.msra.mxu0 0
    %540 = vmatpush.bf16.xpose.msra.mxu0 0
    %541 = vmatpush.bf16.xpose.msra.mxu0 0
    %542 = vmatpush.bf16.xpose.msra.mxu0 0
    %543 = vmatpush.bf16.xpose.msra.mxu0 0
    %544 = vmatpush.bf16.xpose.msra.mxu0 0
    %545 = vmatpush.bf16.xpose.msra.mxu0 %v536
    %546 = vmatmul.bf16.gmra.mxu0 %v533
    %v547 = vpop.f32.mrf.mxu0
    %v548 = vadd.f32 0.0, %v547
    %v549 = vpop.f32.mrf.mxu0
    %550 = vdwg.mxu0
    %551 = vrot.lane.b32.xlu0 %v325, 112
    %v552 = vpop.permute.xlu0 %551
    %553 = vrot.lane.b32.xlu0 %v325, 80
    %v554 = vpop.permute.xlu0 %553
    %v556 = vsel %vm303, %v552, 0
    %v559 = vsel %vm303, %v554, 0
    %561 = vmatpush.bf16.xpose.msra.mxu0 0
    %562 = vmatpush.bf16.xpose.msra.mxu0 0
    %563 = vmatpush.bf16.xpose.msra.mxu0 0
    %564 = vmatpush.bf16.xpose.msra.mxu0 0
    %565 = vmatpush.bf16.xpose.msra.mxu0 0
    %566 = vmatpush.bf16.xpose.msra.mxu0 0
    %567 = vmatpush.bf16.xpose.msra.mxu0 0
    %568 = vmatpush.bf16.xpose.msra.mxu0 %v559
    %569 = vmatmul.bf16.gmra.mxu0 %v556
    %v570 = vpop.f32.mrf.mxu0
    %v571 = vadd.f32 0.0, %v570
    %v572 = vpop.f32.mrf.mxu0
    %573 = vdwg.mxu0
    %v574 = vsel %vm303, %v548, -inf
    %575 = vmax.xlane.f32.xlu0 %v574
    %v576 = vpop.xlane.xlu0 %575
    %v577 = vsel %vm303, %v571, -inf
    %578 = vmax.xlane.f32.xlu0 %v577
    %v579 = vpop.xlane.xlu0 %578
    %v580 = vsub.f32 %v548, %v576
    %v581 = vsub.f32 %v571, %v579
    %v582 = vmul.f32 %v580, 1.442695
    %v583 = vpow.pop %v582
    %v584 = vmul.f32 %v581, 1.442695
    %v585 = vpow.pop %v584
    %v586 = vsel %vm303, %v583, 0.0
    %587 = vadd.xlane.f32.xlu0 %v586
    %v588 = vpop.xlane.xlu0 %587
    %v589 = vsel %vm303, %v585, 0.0
    %590 = vadd.xlane.f32.xlu0 %v589
    %v591 = vpop.xlane.xlu0 %590
    %v592 = vrcp.pop %v588
    %v593 = vrcp.pop %v591
    %v594 = vmul.f32 %v583, %v592
    %v595 = vmul.f32 %v585, %v593
    %v596 = vpack.c.bf16 %v594, %v594
    %v597 = vpack.c.bf16 %v595, %v595
    %598 = vrot.lane.b32.xlu0 %v482, 112
    %v599 = vpop.permute.xlu0 %598
    %v601 = vsel %vm303, %v596, 0
    %v604 = vsel %vm374, %v599, 0
    %606 = vmatpush.bf16.msra.mxu0 0
    %607 = vmatpush.bf16.msra.mxu0 0
    %608 = vmatpush.bf16.msra.mxu0 0
    %609 = vmatpush.bf16.msra.mxu0 0
    %610 = vmatpush.bf16.msra.mxu0 0
    %611 = vmatpush.bf16.msra.mxu0 0
    %612 = vmatpush.bf16.msra.mxu0 0
    %613 = vmatpush.bf16.msra.mxu0 %v604
    %614 = vmatmul.bf16.gmra.mxu0 %v601
    %v615 = vpop.f32.mrf.mxu0
    %v616 = vadd.f32 0.0, %v615
    %v617 = vpop.f32.mrf.mxu0
    %618 = vdwg.mxu0
    %619 = vrot.lane.b32.xlu0 %v506, 112
    %v620 = vpop.permute.xlu0 %619
    %v622 = vsel %vm303, %v597, 0
    %v625 = vsel %vm374, %v620, 0
    %627 = vmatpush.bf16.msra.mxu0 0
    %628 = vmatpush.bf16.msra.mxu0 0
    %629 = vmatpush.bf16.msra.mxu0 0
    %630 = vmatpush.bf16.msra.mxu0 0
    %631 = vmatpush.bf16.msra.mxu0 0
    %632 = vmatpush.bf16.msra.mxu0 0
    %633 = vmatpush.bf16.msra.mxu0 0
    %634 = vmatpush.bf16.msra.mxu0 %v625
    %635 = vmatmul.bf16.gmra.mxu0 %v622
    %v636 = vpop.f32.mrf.mxu0
    %v637 = vadd.f32 0.0, %v636
    %v638 = vpop.f32.mrf.mxu0
    %639 = vdwg.mxu0
    %640 = vrot.lane.b32.xlu0 %v300, 104
    %v641 = vpop.permute.xlu0 %640
    %642 = vrot.lane.b32.xlu0 %v300, 72
    %v643 = vpop.permute.xlu0 %642
    %v645 = vsel %vm303, %v641, 0
    %v648 = vsel %vm303, %v643, 0
    %650 = vmatpush.bf16.xpose.msra.mxu0 0
    %651 = vmatpush.bf16.xpose.msra.mxu0 0
    %652 = vmatpush.bf16.xpose.msra.mxu0 0
    %653 = vmatpush.bf16.xpose.msra.mxu0 0
    %654 = vmatpush.bf16.xpose.msra.mxu0 0
    %655 = vmatpush.bf16.xpose.msra.mxu0 0
    %656 = vmatpush.bf16.xpose.msra.mxu0 0
    %657 = vmatpush.bf16.xpose.msra.mxu0 %v648
    %658 = vmatmul.bf16.gmra.mxu0 %v645
    %v659 = vpop.f32.mrf.mxu0
    %v660 = vadd.f32 0.0, %v659
    %v661 = vpop.f32.mrf.mxu0
    %662 = vdwg.mxu0
    %663 = vrot.lane.b32.xlu0 %v325, 104
    %v664 = vpop.permute.xlu0 %663
    %665 = vrot.lane.b32.xlu0 %v325, 72
    %v666 = vpop.permute.xlu0 %665
    %v668 = vsel %vm303, %v664, 0
    %v671 = vsel %vm303, %v666, 0
    %673 = vmatpush.bf16.xpose.msra.mxu0 0
    %674 = vmatpush.bf16.xpose.msra.mxu0 0
    %675 = vmatpush.bf16.xpose.msra.mxu0 0
    %676 = vmatpush.bf16.xpose.msra.mxu0 0
    %677 = vmatpush.bf16.xpose.msra.mxu0 0
    %678 = vmatpush.bf16.xpose.msra.mxu0 0
    %679 = vmatpush.bf16.xpose.msra.mxu0 0
    %680 = vmatpush.bf16.xpose.msra.mxu0 %v671
    %681 = vmatmul.bf16.gmra.mxu0 %v668
    %v682 = vpop.f32.mrf.mxu0
    %v683 = vadd.f32 0.0, %v682
    %v684 = vpop.f32.mrf.mxu0
    %685 = vdwg.mxu0
    %v686 = vsel %vm303, %v660, -inf
    %687 = vmax.xlane.f32.xlu0 %v686
    %v688 = vpop.xlane.xlu0 %687
    %v689 = vsel %vm303, %v683, -inf
    %690 = vmax.xlane.f32.xlu0 %v689
    %v691 = vpop.xlane.xlu0 %690
    %v692 = vsub.f32 %v660, %v688
    %v693 = vsub.f32 %v683, %v691
    %v694 = vmul.f32 %v692, 1.442695
    %v695 = vpow.pop %v694
    %v696 = vmul.f32 %v693, 1.442695
    %v697 = vpow.pop %v696
    %v698 = vsel %vm303, %v695, 0.0
    %699 = vadd.xlane.f32.xlu0 %v698
    %v700 = vpop.xlane.xlu0 %699
    %v701 = vsel %vm303, %v697, 0.0
    %702 = vadd.xlane.f32.xlu0 %v701
    %v703 = vpop.xlane.xlu0 %702
    %v704 = vrcp.pop %v700
    %v705 = vrcp.pop %v703
    %v706 = vmul.f32 %v695, %v704
    %v707 = vmul.f32 %v697, %v705
    %v708 = vpack.c.bf16 %v706, %v706
    %v709 = vpack.c.bf16 %v707, %v707
    %710 = vrot.lane.b32.xlu0 %v482, 104
    %v711 = vpop.permute.xlu0 %710
    %v713 = vsel %vm303, %v708, 0
    %v716 = vsel %vm374, %v711, 0
    %718 = vmatpush.bf16.msra.mxu0 0
    %719 = vmatpush.bf16.msra.mxu0 0
    %720 = vmatpush.bf16.msra.mxu0 0
    %721 = vmatpush.bf16.msra.mxu0 0
    %722 = vmatpush.bf16.msra.mxu0 0
    %723 = vmatpush.bf16.msra.mxu0 0
    %724 = vmatpush.bf16.msra.mxu0 0
    %725 = vmatpush.bf16.msra.mxu0 %v716
    %726 = vmatmul.bf16.gmra.mxu0 %v713
    %v727 = vpop.f32.mrf.mxu0
    %v728 = vadd.f32 0.0, %v727
    %v729 = vpop.f32.mrf.mxu0
    %730 = vdwg.mxu0
    %731 = vrot.lane.b32.xlu0 %v506, 104
    %v732 = vpop.permute.xlu0 %731
    %v734 = vsel %vm303, %v709, 0
    %v737 = vsel %vm374, %v732, 0
    %739 = vmatpush.bf16.msra.mxu0 0
    %740 = vmatpush.bf16.msra.mxu0 0
    %741 = vmatpush.bf16.msra.mxu0 0
    %742 = vmatpush.bf16.msra.mxu0 0
    %743 = vmatpush.bf16.msra.mxu0 0
    %744 = vmatpush.bf16.msra.mxu0 0
    %745 = vmatpush.bf16.msra.mxu0 0
    %746 = vmatpush.bf16.msra.mxu0 %v737
    %747 = vmatmul.bf16.gmra.mxu0 %v734
    %v748 = vpop.f32.mrf.mxu0
    %v749 = vadd.f32 0.0, %v748
    %v750 = vpop.f32.mrf.mxu0
    %751 = vdwg.mxu0
    %754 = vrot.lane.b32.xlu0 %v501, 8
    %v755 = vpop.permute.xlu0 %754
    %756 = vrot.lane.b32.xlu0 %v525, 8
    %v757 = vpop.permute.xlu0 %756
    %762 = vrot.lane.b32.xlu0 %v616, 16
    %v763 = vpop.permute.xlu0 %762
    %764 = vrot.lane.b32.xlu0 %v637, 16
    %v765 = vpop.permute.xlu0 %764
    %770 = vrot.lane.b32.xlu0 %v728, 24
    %v771 = vpop.permute.xlu0 %770
    %772 = vrot.lane.b32.xlu0 %v749, 24
    %v773 = vpop.permute.xlu0 %772
    %v776 = vsel %vm303, %v388, %v755
    %v777 = vsel %vm303, %v407, %v757
    %vm778 = vcmask 130048
    %v779 = vsel %vm778, %v776, %v763
    %v780 = vsel %vm778, %v777, %v765
    %vm781 = vcmask 195584
    %v782 = vsel %vm781, %v779, %v771
    %v783 = vsel %vm781, %v780, %v773
    %v784 = vpack.c.bf16 %v783, %v782
    %v785 = vld [vmem:[%s19] sm:$0xf]
    %v786 = vld [vmem:[%s19 + $0x4] sm:$0xf]
    %v787 = vld [vmem:[%s19 + $0x8] sm:$0xf]
    %v788 = vld [vmem:[%s19 + $0xc] sm:$0xf]
    %v789 = vld [vmem:[%s21] sm:$0x1]
    %v791 = vperm.slane %v789, 0
    %v797 = vunpack.c.l.b16 %v785
    %v798 = vunpack.c.l.b16 %v786
    %v799 = vunpack.c.l.b16 %v787
    %v800 = vunpack.c.l.b16 %v788
    %v801 = vpack.c.b16 %v798, %v797
    %v802 = vpack.c.b16 %v800, %v799
    %v806 = vsel %vm238, %v784, 0
    %808 = vmatpush.bf16.msra.mxu0 0
    %809 = vmatpush.bf16.msra.mxu0 0
    %810 = vmatpush.bf16.msra.mxu0 0
    %811 = vmatpush.bf16.msra.mxu0 0
    %812 = vmatpush.bf16.msra.mxu0 0
    %813 = vmatpush.bf16.msra.mxu0 0
    %814 = vmatpush.bf16.msra.mxu0 %v802
    %815 = vmatpush.bf16.msra.mxu0 %v801
    %816 = vmatmul.bf16.gmra.mxu0 %v806
    %v817 = vpop.f32.mrf.mxu0
    %v818 = vadd.f32 %v791, %v817
    %v819 = vpop.f32.mrf.mxu0
    %v820 = vadd.f32 %v791, %v819
    %821 = vdwg.mxu0
    %v822 = vadd.f32 %v198, %v818
    %v823 = vadd.f32 %v199, %v820
    %v824 = vsel %vm238, %v822, 0.0
    %825 = vadd.xlane.f32.xlu0 %v824
    %v826 = vpop.xlane.xlu0 %825
    %v827 = vsel %vm238, %v823, 0.0
    %828 = vadd.xlane.f32.xlu0 %v827
    %v829 = vpop.xlane.xlu0 %828
    %v830 = vrcp.pop 32.0
    %v831 = vmul.f32 32.0, %v830
    %v832 = vsub.f32 1.0, %v831
    %v833 = vmul.f32 %v830, %v832
    %v834 = vadd.f32 %v830, %v833
    %vm835 = vweird.f32 %v830
    %v836 = vsel %vm835, %v830, %v834
    %v837 = vmul.f32 %v826, %v836
    %v838 = vmul.f32 %v829, %v836
    %v839 = vsub.f32 %v822, %v837
    %v840 = vsub.f32 %v823, %v838
    %v841 = vmul.f32 %v839, %v839
    %v842 = vmul.f32 %v840, %v840
    %v843 = vsel %vm238, %v841, 0.0
    %844 = vadd.xlane.f32.xlu0 %v843
    %v845 = vpop.xlane.xlu0 %844
    %v846 = vsel %vm238, %v842, 0.0
    %847 = vadd.xlane.f32.xlu0 %v846
    %v848 = vpop.xlane.xlu0 %847
    %v849 = vmul.f32 %v845, %v836
    %v850 = vmul.f32 %v848, %v836
    %v851 = vadd.f32 %v849, 1e-05
    %v852 = vadd.f32 %v850, 1e-05
    %v853 = vrsqrt.pop %v851
    %v854 = vmul.f32 %v853, %v851
    %v855 = vmul.f32 %v854, %v853
    %v856 = vmul.f32 0.5, %v855
    %v857 = vsub.f32 1.5, %v856
    %v858 = vmul.f32 %v853, %v857
    %vm859 = vweird.f32 %v851
    %vm860 = vweird.f32 %v853
    %vm861 = vmor %vm859, %vm860
    %v862 = vsel %vm861, %v853, %v858
    %v863 = vrsqrt.pop %v852
    %v864 = vmul.f32 %v863, %v852
    %v865 = vmul.f32 %v864, %v863
    %v866 = vmul.f32 0.5, %v865
    %v867 = vsub.f32 1.5, %v866
    %v868 = vmul.f32 %v863, %v867
    %vm869 = vweird.f32 %v852
    %vm870 = vweird.f32 %v863
    %vm871 = vmor %vm869, %vm870
    %v872 = vsel %vm871, %v863, %v868
    %v873 = vmul.f32 %v839, %v862
    %v874 = vmul.f32 %v840, %v872
    %v875 = vld [vmem:[%s47] sm:$0x1]
    %v877 = vperm.slane %v875, 0
    %v879 = vmul.f32 %v873, %v877
    %v880 = vmul.f32 %v874, %v877
    %v881 = vld [vmem:[%s49] sm:$0x1]
    %v883 = vperm.slane %v881, 0
    %v885 = vadd.f32 %v879, %v883
    %v886 = vadd.f32 %v880, %v883
    %v887 = vadd.f32 %v885, %v206
    %v888 = vadd.f32 %v886, %v206
    %v889 = vadd.f32 %v200, %v207
    %v890 = vadd.f32 %v201, %v208
    %v891 = vadd.f32 %v202, %v207
    %v892 = vadd.f32 %v203, %v208
    %v893 = vpack.c.bf16 %v888, %v887
    %v894 = vld [vmem:[%s23] sm:$0xf]
    %v895 = vld [vmem:[%s23 + $0x4] sm:$0xf]
    %v896 = vld [vmem:[%s23 + $0x8] sm:$0xf]
    %v897 = vld [vmem:[%s23 + $0xc] sm:$0xf]
    %v898 = vld [vmem:[#allocation5] sm:$0x1]
    %v900 = vperm.slane %v898, 0
    %v906 = vunpack.c.l.b16 %v894
    %v907 = vunpack.c.l.b16 %v895
    %v908 = vunpack.c.l.b16 %v896
    %v909 = vunpack.c.l.b16 %v897
    %v910 = vpack.c.b16 %v907, %v906
    %v911 = vpack.c.b16 %v909, %v908
    %v915 = vsel %vm238, %v893, 0
    %917 = vmatpush.bf16.msra.mxu0 0
    %918 = vmatpush.bf16.msra.mxu0 0
    %919 = vmatpush.bf16.msra.mxu0 0
    %920 = vmatpush.bf16.msra.mxu0 0
    %921 = vmatpush.bf16.msra.mxu0 0
    %922 = vmatpush.bf16.msra.mxu0 0
    %923 = vmatpush.bf16.msra.mxu0 %v911
    %924 = vmatpush.bf16.msra.mxu0 %v910
    %925 = vmatmul.bf16.gmra.mxu0 %v915
    %v926 = vpop.f32.mrf.mxu0
    %v927 = vadd.f32 %v900, %v926
    %v928 = vpop.f32.mrf.mxu0
    %v929 = vadd.f32 %v900, %v928
    %930 = vdwg.mxu0
    %v935 = vrot.slane %v889, 2
    %v936 = vrot.slane %v889, 4
    %v937 = vrot.slane %v889, 6
    %v938 = vrot.slane %v891, 2
    %v939 = vrot.slane %v891, 4
    %v940 = vrot.slane %v891, 6
    %941 = vst [vmem:[#allocation1] ss:$4 sm:$0xff] %v889
    %s942 = scalar_lea.vmem [#allocation1], 1
    %943 = vst [vmem:[%s942] ss:$4 sm:$0xff] %v935
    %s944 = scalar_lea.vmem [#allocation1], 2
    %945 = vst [vmem:[%s944] ss:$4 sm:$0xff] %v936
    %s946 = scalar_lea.vmem [#allocation1], 3
    %947 = vst [vmem:[%s946] ss:$4 sm:$0xff] %v937
    %s948 = scalar_lea.vmem [#allocation1], 32
    %949 = vst [vmem:[%s948] ss:$4 sm:$0xff] %v890
    %s950 = scalar_lea.vmem [#allocation1], 33
    %951 = vst [vmem:[%s950] ss:$4 sm:$0xff] %v891
    %s952 = scalar_lea.vmem [#allocation1], 34
    %953 = vst [vmem:[%s952] ss:$4 sm:$0xff] %v938
    %s954 = scalar_lea.vmem [#allocation1], 35
    %955 = vst [vmem:[%s954] ss:$4 sm:$0xff] %v939
    %v956 = vld.sshfl [vmem:[#allocation1] sm:$0xff pattern:$0x73625140]
    %v957 = vld.sshfl [vmem:[#allocation1 + $0x20] sm:$0xff pattern:$0x73625140]
    %958 = vst [vmem:[#allocation1] ss:$4 sm:$0xff] %v940
    %959 = vst [vmem:[%s942] ss:$4 sm:$0xff] %v892
    %v960 = vld.sshfl [vmem:[#allocation1] sm:$0xff pattern:$0x73625140]
    %v964 = vpack.c.bf16 %v957, %v956
    %v965 = vpack.c.bf16 %v960, %v960
    %v966 = vld [vmem:[%s27] sm:$0xf]
    %v967 = vld [vmem:[%s27 + $0x4] sm:$0xf]
    %v968 = vld [vmem:[%s27 + $0x8] sm:$0xf]
    %v969 = vld [vmem:[%s27 + $0xc] sm:$0xf]
    %v970 = vld [vmem:[%s29] sm:$0x1]
    %v972 = vperm.slane %v970, 0
    %v978 = vunpack.c.l.b16 %v966
    %v979 = vunpack.c.l.b16 %v967
    %v980 = vunpack.c.l.b16 %v968
    %v981 = vunpack.c.l.b16 %v969
    %v982 = vpack.c.b16 %v979, %v978
    %v983 = vpack.c.b16 %v981, %v980
    %v987 = vsel %vm238, %v964, 0
    %v990 = vsel %vm238, %v965, 0
    %992 = vmatpush.bf16.msra.mxu0 0
    %993 = vmatpush.bf16.msra.mxu0 0
    %994 = vmatpush.bf16.msra.mxu0 0
    %995 = vmatpush.bf16.msra.mxu0 0
    %996 = vmatpush.bf16.msra.mxu0 0
    %997 = vmatpush.bf16.msra.mxu0 0
    %998 = vmatpush.bf16.msra.mxu0 %v983
    %999 = vmatpush.bf16.msra.mxu0 %v982
    %1000 = vmatmul.bf16.gmra.mxu0 %v987
    %v1001 = vpop.f32.mrf.mxu0
    %v1002 = vadd.f32 %v972, %v1001
    %v1003 = vpop.f32.mrf.mxu0
    %v1004 = vadd.f32 %v972, %v1003
    %1005 = vmatmul.bf16.gmra.mxu0 %v990
    %v1006 = vpop.f32.mrf.mxu0
    %v1007 = vadd.f32 %v972, %v1006
    %v1008 = vpop.f32.mrf.mxu0
    %1009 = vdwg.mxu0
    %v1013 = vrot.slane %v1002, 2
    %v1014 = vrot.slane %v1002, 4
    %v1015 = vrot.slane %v1002, 6
    %v1016 = vrot.slane %v1004, 2
    %v1017 = vrot.slane %v1004, 4
    %v1018 = vrot.slane %v1004, 6
    %v1019 = vrot.slane %v1007, 2
    %v1024 = vrot.slane %v200, 2
    %v1025 = vrot.slane %v200, 4
    %v1026 = vrot.slane %v200, 6
    %v1027 = vrot.slane %v202, 2
    %v1028 = vrot.slane %v202, 4
    %v1029 = vrot.slane %v202, 6
    %1030 = vst [vmem:[#allocation1] ss:$4 sm:$0xff] %v200
    %s1031 = scalar_lea.vmem [#allocation1], 1
    %1032 = vst [vmem:[%s1031] ss:$4 sm:$0xff] %v1024
    %s1033 = scalar_lea.vmem [#allocation1], 2
    %1034 = vst [vmem:[%s1033] ss:$4 sm:$0xff] %v1025
    %s1035 = scalar_lea.vmem [#allocation1], 3
    %1036 = vst [vmem:[%s1035] ss:$4 sm:$0xff] %v1026
    %s1037 = scalar_lea.vmem [#allocation1], 32
    %1038 = vst [vmem:[%s1037] ss:$4 sm:$0xff] %v201
    %s1039 = scalar_lea.vmem [#allocation1], 33
    %1040 = vst [vmem:[%s1039] ss:$4 sm:$0xff] %v202
    %s1041 = scalar_lea.vmem [#allocation1], 34
    %1042 = vst [vmem:[%s1041] ss:$4 sm:$0xff] %v1027
    %s1043 = scalar_lea.vmem [#allocation1], 35
    %1044 = vst [vmem:[%s1043] ss:$4 sm:$0xff] %v1028
    %v1045 = vld.sshfl [vmem:[#allocation1] sm:$0xff pattern:$0x73625140]
    %v1046 = vld.sshfl [vmem:[#allocation1 + $0x20] sm:$0xff pattern:$0x73625140]
    %1047 = vst [vmem:[#allocation1] ss:$4 sm:$0xff] %v1029
    %1048 = vst [vmem:[%s1031] ss:$4 sm:$0xff] %v203
    %v1049 = vld.sshfl [vmem:[#allocation1] sm:$0xff pattern:$0x73625140]
    %v1053 = vpack.c.bf16 %v1046, %v1045
    %v1054 = vpack.c.bf16 %v1049, %v1049
    %v1055 = vld [vmem:[#allocation7] sm:$0xf]
    %v1056 = vld [vmem:[#allocation7 + $0x4] sm:$0xf]
    %v1057 = vld [vmem:[#allocation7 + $0x8] sm:$0xf]
    %v1058 = vld [vmem:[#allocation7 + $0xc] sm:$0xf]
    %v1059 = vld [vmem:[%s33] sm:$0x1]
    %v1061 = vperm.slane %v1059, 0
    %v1067 = vunpack.c.l.b16 %v1055
    %v1068 = vunpack.c.l.b16 %v1056
    %v1069 = vunpack.c.l.b16 %v1057
    %v1070 = vunpack.c.l.b16 %v1058
    %v1071 = vpack.c.b16 %v1068, %v1067
    %v1072 = vpack.c.b16 %v1070, %v1069
    %v1076 = vsel %vm238, %v1053, 0
    %v1079 = vsel %vm238, %v1054, 0
    %1081 = vmatpush.bf16.msra.mxu0 0
    %1082 = vmatpush.bf16.msra.mxu0 0
    %1083 = vmatpush.bf16.msra.mxu0 0
    %1084 = vmatpush.bf16.msra.mxu0 0
    %1085 = vmatpush.bf16.msra.mxu0 0
    %1086 = vmatpush.bf16.msra.mxu0 0
    %1087 = vmatpush.bf16.msra.mxu0 %v1072
    %1088 = vmatpush.bf16.msra.mxu0 %v1071
    %1089 = vmatmul.bf16.gmra.mxu0 %v1076
    %v1090 = vpop.f32.mrf.mxu0
    %v1091 = vadd.f32 %v1061, %v1090
    %v1092 = vpop.f32.mrf.mxu0
    %v1093 = vadd.f32 %v1061, %v1092
    %1094 = vmatmul.bf16.gmra.mxu0 %v1079
    %v1095 = vpop.f32.mrf.mxu0
    %v1096 = vadd.f32 %v1061, %v1095
    %v1097 = vpop.f32.mrf.mxu0
    %1098 = vdwg.mxu0
    %v1102 = vrot.slane %v1091, 2
    %v1103 = vrot.slane %v1091, 4
    %v1104 = vrot.slane %v1091, 6
    %v1105 = vrot.slane %v1093, 2
    %v1106 = vrot.slane %v1093, 4
    %v1107 = vrot.slane %v1093, 6
    %v1108 = vrot.slane %v1096, 2
    %v1109 = vpack.c.bf16 %v927, %v927
    %v1110 = vpack.c.bf16 %v929, %v929
    %1111 = vst [vmem:[#allocation1] ss:$4 sm:$0xff] %v1002
    %s1112 = scalar_lea.vmem [#allocation1], 1
    %1113 = vst [vmem:[%s1112] ss:$4 sm:$0xff] %v1013
    %s1114 = scalar_lea.vmem [#allocation1], 2
    %1115 = vst [vmem:[%s1114] ss:$4 sm:$0xff] %v1014
    %s1116 = scalar_lea.vmem [#allocation1], 3
    %1117 = vst [vmem:[%s1116] ss:$4 sm:$0xff] %v1015
    %s1118 = scalar_lea.vmem [#allocation1], 32
    %1119 = vst [vmem:[%s1118] ss:$4 sm:$0xff] %v1004
    %v1120 = vld.sshfl [vmem:[#allocation1] sm:$0xff pattern:$0x73625140]
    %v1121 = vld.sshfl [vmem:[#allocation1 + $0x20] sm:$0xff pattern:$0x73625140]
    %1122 = vst [vmem:[#allocation1] ss:$4 sm:$0xff] %v1016
    %1123 = vst [vmem:[%s1112] ss:$4 sm:$0xff] %v1017
    %1124 = vst [vmem:[%s1114] ss:$4 sm:$0xff] %v1018
    %1125 = vst [vmem:[%s1116] ss:$4 sm:$0xff] %v1007
    %1126 = vst [vmem:[%s1118] ss:$4 sm:$0xff] %v1019
    %v1127 = vld.sshfl [vmem:[#allocation1] sm:$0xff pattern:$0x73625140]
    %v1128 = vld.sshfl [vmem:[#allocation1 + $0x20] sm:$0xff pattern:$0x73625140]
    %v1133 = vpack.c.bf16 %v1120, %v1120
    %v1134 = vpack.c.bf16 %v1121, %v1121
    %v1135 = vpack.c.bf16 %v1127, %v1127
    %v1136 = vpack.c.bf16 %v1128, %v1128
    %1137 = vst [vmem:[#allocation1] ss:$4 sm:$0xff] %v1091
    %s1138 = scalar_lea.vmem [#allocation1], 1
    %1139 = vst [vmem:[%s1138] ss:$4 sm:$0xff] %v1102
    %s1140 = scalar_lea.vmem [#allocation1], 2
    %1141 = vst [vmem:[%s1140] ss:$4 sm:$0xff] %v1103
    %s1142 = scalar_lea.vmem [#allocation1], 3
    %1143 = vst [vmem:[%s1142] ss:$4 sm:$0xff] %v1104
    %s1144 = scalar_lea.vmem [#allocation1], 32
    %1145 = vst [vmem:[%s1144] ss:$4 sm:$0xff] %v1093
    %v1146 = vld.sshfl [vmem:[#allocation1] sm:$0xff pattern:$0x73625140]
    %v1147 = vld.sshfl [vmem:[#allocation1 + $0x20] sm:$0xff pattern:$0x73625140]
    %1148 = vst [vmem:[#allocation1] ss:$4 sm:$0xff] %v1105
    %1149 = vst [vmem:[%s1138] ss:$4 sm:$0xff] %v1106
    %1150 = vst [vmem:[%s1140] ss:$4 sm:$0xff] %v1107
    %1151 = vst [vmem:[%s1142] ss:$4 sm:$0xff] %v1096
    %1152 = vst [vmem:[%s1144] ss:$4 sm:$0xff] %v1108
    %v1153 = vld.sshfl [vmem:[#allocation1] sm:$0xff pattern:$0x73625140]
    %v1154 = vld.sshfl [vmem:[#allocation1 + $0x20] sm:$0xff pattern:$0x73625140]
    %v1159 = vpack.c.bf16 %v1146, %v1146
    %v1160 = vpack.c.bf16 %v1147, %v1147
    %v1161 = vpack.c.bf16 %v1153, %v1153
    %v1162 = vpack.c.bf16 %v1154, %v1154
    %v1165 = vunpack.c.l.b16 %v1133
    %v1166 = vunpack.c.l.b16 %v1134
    %v1167 = vpack.c.b16 %v1166, %v1165
    %v1169 = vsel %vm303, %v1109, 0
    %v1172 = vsel %vm303, %v1167, 0
    %1174 = vmatpush.bf16.xpose.msra.mxu0 0
    %1175 = vmatpush.bf16.xpose.msra.mxu0 0
    %1176 = vmatpush.bf16.xpose.msra.mxu0 0
    %1177 = vmatpush.bf16.xpose.msra.mxu0 0
    %1178 = vmatpush.bf16.xpose.msra.mxu0 0
    %1179 = vmatpush.bf16.xpose.msra.mxu0 0
    %1180 = vmatpush.bf16.xpose.msra.mxu0 0
    %1181 = vmatpush.bf16.xpose.msra.mxu0 %v1172
    %1182 = vmatmul.bf16.gmra.mxu0 %v1169
    %v1183 = vpop.f32.mrf.mxu0
    %v1184 = vadd.f32 0.0, %v1183
    %v1185 = vpop.f32.mrf.mxu0
    %1186 = vdwg.mxu0
    %v1189 = vunpack.c.l.b16 %v1135
    %v1190 = vunpack.c.l.b16 %v1136
    %v1191 = vpack.c.b16 %v1190, %v1189
    %v1193 = vsel %vm303, %v1110, 0
    %v1196 = vsel %vm303, %v1191, 0
    %1198 = vmatpush.bf16.xpose.msra.mxu0 0
    %1199 = vmatpush.bf16.xpose.msra.mxu0 0
    %1200 = vmatpush.bf16.xpose.msra.mxu0 0
    %1201 = vmatpush.bf16.xpose.msra.mxu0 0
    %1202 = vmatpush.bf16.xpose.msra.mxu0 0
    %1203 = vmatpush.bf16.xpose.msra.mxu0 0
    %1204 = vmatpush.bf16.xpose.msra.mxu0 0
    %1205 = vmatpush.bf16.xpose.msra.mxu0 %v1196
    %1206 = vmatmul.bf16.gmra.mxu0 %v1193
    %v1207 = vpop.f32.mrf.mxu0
    %v1208 = vadd.f32 0.0, %v1207
    %v1209 = vpop.f32.mrf.mxu0
    %1210 = vdwg.mxu0
    %vm1211 = vcmask 80896
    %v1212 = vsel %vm1211, %v1184, -inf
    %1213 = vmax.xlane.f32.xlu0 %v1212
    %v1214 = vpop.xlane.xlu0 %1213
    %v1215 = vsel %vm1211, %v1208, -inf
    %1216 = vmax.xlane.f32.xlu0 %v1215
    %v1217 = vpop.xlane.xlu0 %1216
    %v1218 = vsub.f32 %v1184, %v1214
    %v1219 = vsub.f32 %v1208, %v1217
    %v1220 = vmul.f32 %v1218, 1.442695
    %v1221 = vpow.pop %v1220
    %v1222 = vmul.f32 %v1219, 1.442695
    %v1223 = vpow.pop %v1222
    %v1224 = vsel %vm1211, %v1221, 0.0
    %1225 = vadd.xlane.f32.xlu0 %v1224
    %v1226 = vpop.xlane.xlu0 %1225
    %v1227 = vsel %vm1211, %v1223, 0.0
    %1228 = vadd.xlane.f32.xlu0 %v1227
    %v1229 = vpop.xlane.xlu0 %1228
    %v1230 = vrcp.pop %v1226
    %v1231 = vrcp.pop %v1229
    %v1232 = vmul.f32 %v1221, %v1230
    %v1233 = vmul.f32 %v1223, %v1231
    %v1234 = vpack.c.bf16 %v1232, %v1232
    %v1235 = vpack.c.bf16 %v1233, %v1233
    %v1238 = vunpack.c.l.b16 %v1159
    %v1239 = vunpack.c.l.b16 %v1160
    %v1240 = vpack.c.b16 %v1239, %v1238
    %v1242 = vsel %vm1211, %v1234, 0
    %vm1244 = vcmask 1044480
    %v1246 = vsel %vm1244, %v1240, 0
    %1248 = vmatpush.bf16.msra.mxu0 0
    %1249 = vmatpush.bf16.msra.mxu0 0
    %1250 = vmatpush.bf16.msra.mxu0 0
    %1251 = vmatpush.bf16.msra.mxu0 0
    %1252 = vmatpush.bf16.msra.mxu0 0
    %1253 = vmatpush.bf16.msra.mxu0 0
    %1254 = vmatpush.bf16.msra.mxu0 0
    %1255 = vmatpush.bf16.msra.mxu0 %v1246
    %1256 = vmatmul.bf16.gmra.mxu0 %v1242
    %v1257 = vpop.f32.mrf.mxu0
    %v1258 = vadd.f32 0.0, %v1257
    %v1259 = vpop.f32.mrf.mxu0
    %1260 = vdwg.mxu0
    %v1263 = vunpack.c.l.b16 %v1161
    %v1264 = vunpack.c.l.b16 %v1162
    %v1265 = vpack.c.b16 %v1264, %v1263
    %v1267 = vsel %vm1211, %v1235, 0
    %v1270 = vsel %vm1244, %v1265, 0
    %1272 = vmatpush.bf16.msra.mxu0 0
    %1273 = vmatpush.bf16.msra.mxu0 0
    %1274 = vmatpush.bf16.msra.mxu0 0
    %1275 = vmatpush.bf16.msra.mxu0 0
    %1276 = vmatpush.bf16.msra.mxu0 0
    %1277 = vmatpush.bf16.msra.mxu0 0
    %1278 = vmatpush.bf16.msra.mxu0 0
    %1279 = vmatpush.bf16.msra.mxu0 %v1270
    %1280 = vmatmul.bf16.gmra.mxu0 %v1267
    %v1281 = vpop.f32.mrf.mxu0
    %v1282 = vadd.f32 0.0, %v1281
    %v1283 = vpop.f32.mrf.mxu0
    %1284 = vdwg.mxu0
    %v1286 = vunpack.c.l.b16 %v1109
    %v1287 = vpack.c.b16 %v1286, %v1286
    %1288 = vrot.lane.b32.xlu0 %v1287, 120
    %v1289 = vpop.permute.xlu0 %1288
    %1290 = vrot.lane.b32.xlu0 %v1167, 120
    %v1291 = vpop.permute.xlu0 %1290
    %v1293 = vsel %vm303, %v1289, 0
    %v1296 = vsel %vm303, %v1291, 0
    %1298 = vmatpush.bf16.xpose.msra.mxu0 0
    %1299 = vmatpush.bf16.xpose.msra.mxu0 0
    %1300 = vmatpush.bf16.xpose.msra.mxu0 0
    %1301 = vmatpush.bf16.xpose.msra.mxu0 0
    %1302 = vmatpush.bf16.xpose.msra.mxu0 0
    %1303 = vmatpush.bf16.xpose.msra.mxu0 0
    %1304 = vmatpush.bf16.xpose.msra.mxu0 0
    %1305 = vmatpush.bf16.xpose.msra.mxu0 %v1296
    %1306 = vmatmul.bf16.gmra.mxu0 %v1293
    %v1307 = vpop.f32.mrf.mxu0
    %v1308 = vadd.f32 0.0, %v1307
    %v1309 = vpop.f32.mrf.mxu0
    %1310 = vdwg.mxu0
    %v1312 = vunpack.c.l.b16 %v1110
    %v1313 = vpack.c.b16 %v1312, %v1312
    %1314 = vrot.lane.b32.xlu0 %v1313, 120
    %v1315 = vpop.permute.xlu0 %1314
    %1316 = vrot.lane.b32.xlu0 %v1191, 120
    %v1317 = vpop.permute.xlu0 %1316
    %v1319 = vsel %vm303, %v1315, 0
    %v1322 = vsel %vm303, %v1317, 0
    %1324 = vmatpush.bf16.xpose.msra.mxu0 0
    %1325 = vmatpush.bf16.xpose.msra.mxu0 0
    %1326 = vmatpush.bf16.xpose.msra.mxu0 0
    %1327 = vmatpush.bf16.xpose.msra.mxu0 0
    %1328 = vmatpush.bf16.xpose.msra.mxu0 0
    %1329 = vmatpush.bf16.xpose.msra.mxu0 0
    %1330 = vmatpush.bf16.xpose.msra.mxu0 0
    %1331 = vmatpush.bf16.xpose.msra.mxu0 %v1322
    %1332 = vmatmul.bf16.gmra.mxu0 %v1319
    %v1333 = vpop.f32.mrf.mxu0
    %v1334 = vadd.f32 0.0, %v1333
    %v1335 = vpop.f32.mrf.mxu0
    %1336 = vdwg.mxu0
    %v1337 = vsel %vm1211, %v1308, -inf
    %1338 = vmax.xlane.f32.xlu0 %v1337
    %v1339 = vpop.xlane.xlu0 %1338
    %v1340 = vsel %vm1211, %v1334, -inf
    %1341 = vmax.xlane.f32.xlu0 %v1340
    %v1342 = vpop.xlane.xlu0 %1341
    %v1343 = vsub.f32 %v1308, %v1339
    %v1344 = vsub.f32 %v1334, %v1342
    %v1345 = vmul.f32 %v1343, 1.442695
    %v1346 = vpow.pop %v1345
    %v1347 = vmul.f32 %v1344, 1.442695
    %v1348 = vpow.pop %v1347
    %v1349 = vsel %vm1211, %v1346, 0.0
    %1350 = vadd.xlane.f32.xlu0 %v1349
    %v1351 = vpop.xlane.xlu0 %1350
    %v1352 = vsel %vm1211, %v1348, 0.0
    %1353 = vadd.xlane.f32.xlu0 %v1352
    %v1354 = vpop.xlane.xlu0 %1353
    %v1355 = vrcp.pop %v1351
    %v1356 = vrcp.pop %v1354
    %v1357 = vmul.f32 %v1346, %v1355
    %v1358 = vmul.f32 %v1348, %v1356
    %v1359 = vpack.c.bf16 %v1357, %v1357
    %v1360 = vpack.c.bf16 %v1358, %v1358
    %1361 = vrot.lane.b32.xlu0 %v1240, 120
    %v1362 = vpop.permute.xlu0 %1361
    %v1364 = vsel %vm1211, %v1359, 0
    %v1367 = vsel %vm1244, %v1362, 0
    %1369 = vmatpush.bf16.msra.mxu0 0
    %1370 = vmatpush.bf16.msra.mxu0 0
    %1371 = vmatpush.bf16.msra.mxu0 0
    %1372 = vmatpush.bf16.msra.mxu0 0
    %1373 = vmatpush.bf16.msra.mxu0 0
    %1374 = vmatpush.bf16.msra.mxu0 0
    %1375 = vmatpush.bf16.msra.mxu0 0
    %1376 = vmatpush.bf16.msra.mxu0 %v1367
    %1377 = vmatmul.bf16.gmra.mxu0 %v1364
    %v1378 = vpop.f32.mrf.mxu0
    %v1379 = vadd.f32 0.0, %v1378
    %v1380 = vpop.f32.mrf.mxu0
    %1381 = vdwg.mxu0
    %1382 = vrot.lane.b32.xlu0 %v1265, 120
    %v1383 = vpop.permute.xlu0 %1382
    %v1385 = vsel %vm1211, %v1360, 0
    %v1388 = vsel %vm1244, %v1383, 0
    %1390 = vmatpush.bf16.msra.mxu0 0
    %1391 = vmatpush.bf16.msra.mxu0 0
    %1392 = vmatpush.bf16.msra.mxu0 0
    %1393 = vmatpush.bf16.msra.mxu0 0
    %1394 = vmatpush.bf16.msra.mxu0 0
    %1395 = vmatpush.bf16.msra.mxu0 0
    %1396 = vmatpush.bf16.msra.mxu0 0
    %1397 = vmatpush.bf16.msra.mxu0 %v1388
    %1398 = vmatmul.bf16.gmra.mxu0 %v1385
    %v1399 = vpop.f32.mrf.mxu0
    %v1400 = vadd.f32 0.0, %v1399
    %v1401 = vpop.f32.mrf.mxu0
    %1402 = vdwg.mxu0
    %1403 = vrot.lane.b32.xlu0 %v1287, 112
    %v1404 = vpop.permute.xlu0 %1403
    %1405 = vrot.lane.b32.xlu0 %v1167, 112
    %v1406 = vpop.permute.xlu0 %1405
    %v1408 = vsel %vm303, %v1404, 0
    %v1411 = vsel %vm303, %v1406, 0
    %1413 = vmatpush.bf16.xpose.msra.mxu0 0
    %1414 = vmatpush.bf16.xpose.msra.mxu0 0
    %1415 = vmatpush.bf16.xpose.msra.mxu0 0
    %1416 = vmatpush.bf16.xpose.msra.mxu0 0
    %1417 = vmatpush.bf16.xpose.msra.mxu0 0
    %1418 = vmatpush.bf16.xpose.msra.mxu0 0
    %1419 = vmatpush.bf16.xpose.msra.mxu0 0
    %1420 = vmatpush.bf16.xpose.msra.mxu0 %v1411
    %1421 = vmatmul.bf16.gmra.mxu0 %v1408
    %v1422 = vpop.f32.mrf.mxu0
    %v1423 = vadd.f32 0.0, %v1422
    %v1424 = vpop.f32.mrf.mxu0
    %1425 = vdwg.mxu0
    %1426 = vrot.lane.b32.xlu0 %v1313, 112
    %v1427 = vpop.permute.xlu0 %1426
    %1428 = vrot.lane.b32.xlu0 %v1191, 112
    %v1429 = vpop.permute.xlu0 %1428
    %v1431 = vsel %vm303, %v1427, 0
    %v1434 = vsel %vm303, %v1429, 0
    %1436 = vmatpush.bf16.xpose.msra.mxu0 0
    %1437 = vmatpush.bf16.xpose.msra.mxu0 0
    %1438 = vmatpush.bf16.xpose.msra.mxu0 0
    %1439 = vmatpush.bf16.xpose.msra.mxu0 0
    %1440 = vmatpush.bf16.xpose.msra.mxu0 0
    %1441 = vmatpush.bf16.xpose.msra.mxu0 0
    %1442 = vmatpush.bf16.xpose.msra.mxu0 0
    %1443 = vmatpush.bf16.xpose.msra.mxu0 %v1434
    %1444 = vmatmul.bf16.gmra.mxu0 %v1431
    %v1445 = vpop.f32.mrf.mxu0
    %v1446 = vadd.f32 0.0, %v1445
    %v1447 = vpop.f32.mrf.mxu0
    %1448 = vdwg.mxu0
    %v1449 = vsel %vm1211, %v1423, -inf
    %1450 = vmax.xlane.f32.xlu0 %v1449
    %v1451 = vpop.xlane.xlu0 %1450
    %v1452 = vsel %vm1211, %v1446, -inf
    %1453 = vmax.xlane.f32.xlu0 %v1452
    %v1454 = vpop.xlane.xlu0 %1453
    %v1455 = vsub.f32 %v1423, %v1451
    %v1456 = vsub.f32 %v1446, %v1454
    %v1457 = vmul.f32 %v1455, 1.442695
    %v1458 = vpow.pop %v1457
    %v1459 = vmul.f32 %v1456, 1.442695
    %v1460 = vpow.pop %v1459
    %v1461 = vsel %vm1211, %v1458, 0.0
    %1462 = vadd.xlane.f32.xlu0 %v1461
    %v1463 = vpop.xlane.xlu0 %1462
    %v1464 = vsel %vm1211, %v1460, 0.0
    %1465 = vadd.xlane.f32.xlu0 %v1464
    %v1466 = vpop.xlane.xlu0 %1465
    %v1467 = vrcp.pop %v1463
    %v1468 = vrcp.pop %v1466
    %v1469 = vmul.f32 %v1458, %v1467
    %v1470 = vmul.f32 %v1460, %v1468
    %v1471 = vpack.c.bf16 %v1469, %v1469
    %v1472 = vpack.c.bf16 %v1470, %v1470
    %1473 = vrot.lane.b32.xlu0 %v1240, 112
    %v1474 = vpop.permute.xlu0 %1473
    %v1476 = vsel %vm1211, %v1471, 0
    %v1479 = vsel %vm1244, %v1474, 0
    %1481 = vmatpush.bf16.msra.mxu0 0
    %1482 = vmatpush.bf16.msra.mxu0 0
    %1483 = vmatpush.bf16.msra.mxu0 0
    %1484 = vmatpush.bf16.msra.mxu0 0
    %1485 = vmatpush.bf16.msra.mxu0 0
    %1486 = vmatpush.bf16.msra.mxu0 0
    %1487 = vmatpush.bf16.msra.mxu0 0
    %1488 = vmatpush.bf16.msra.mxu0 %v1479
    %1489 = vmatmul.bf16.gmra.mxu0 %v1476
    %v1490 = vpop.f32.mrf.mxu0
    %v1491 = vadd.f32 0.0, %v1490
    %v1492 = vpop.f32.mrf.mxu0
    %1493 = vdwg.mxu0
    %1494 = vrot.lane.b32.xlu0 %v1265, 112
    %v1495 = vpop.permute.xlu0 %1494
    %v1497 = vsel %vm1211, %v1472, 0
    %v1500 = vsel %vm1244, %v1495, 0
    %1502 = vmatpush.bf16.msra.mxu0 0
    %1503 = vmatpush.bf16.msra.mxu0 0
    %1504 = vmatpush.bf16.msra.mxu0 0
    %1505 = vmatpush.bf16.msra.mxu0 0
    %1506 = vmatpush.bf16.msra.mxu0 0
    %1507 = vmatpush.bf16.msra.mxu0 0
    %1508 = vmatpush.bf16.msra.mxu0 0
    %1509 = vmatpush.bf16.msra.mxu0 %v1500
    %1510 = vmatmul.bf16.gmra.mxu0 %v1497
    %v1511 = vpop.f32.mrf.mxu0
    %v1512 = vadd.f32 0.0, %v1511
    %v1513 = vpop.f32.mrf.mxu0
    %1514 = vdwg.mxu0
    %1515 = vrot.lane.b32.xlu0 %v1287, 104
    %v1516 = vpop.permute.xlu0 %1515
    %1517 = vrot.lane.b32.xlu0 %v1167, 104
    %v1518 = vpop.permute.xlu0 %1517
    %v1520 = vsel %vm303, %v1516, 0
    %v1523 = vsel %vm303, %v1518, 0
    %1525 = vmatpush.bf16.xpose.msra.mxu0 0
    %1526 = vmatpush.bf16.xpose.msra.mxu0 0
    %1527 = vmatpush.bf16.xpose.msra.mxu0 0
    %1528 = vmatpush.bf16.xpose.msra.mxu0 0
    %1529 = vmatpush.bf16.xpose.msra.mxu0 0
    %1530 = vmatpush.bf16.xpose.msra.mxu0 0
    %1531 = vmatpush.bf16.xpose.msra.mxu0 0
    %1532 = vmatpush.bf16.xpose.msra.mxu0 %v1523
    %1533 = vmatmul.bf16.gmra.mxu0 %v1520
    %v1534 = vpop.f32.mrf.mxu0
    %v1535 = vadd.f32 0.0, %v1534
    %v1536 = vpop.f32.mrf.mxu0
    %1537 = vdwg.mxu0
    %1538 = vrot.lane.b32.xlu0 %v1313, 104
    %v1539 = vpop.permute.xlu0 %1538
    %1540 = vrot.lane.b32.xlu0 %v1191, 104
    %v1541 = vpop.permute.xlu0 %1540
    %v1543 = vsel %vm303, %v1539, 0
    %v1546 = vsel %vm303, %v1541, 0
    %1548 = vmatpush.bf16.xpose.msra.mxu0 0
    %1549 = vmatpush.bf16.xpose.msra.mxu0 0
    %1550 = vmatpush.bf16.xpose.msra.mxu0 0
    %1551 = vmatpush.bf16.xpose.msra.mxu0 0
    %1552 = vmatpush.bf16.xpose.msra.mxu0 0
    %1553 = vmatpush.bf16.xpose.msra.mxu0 0
    %1554 = vmatpush.bf16.xpose.msra.mxu0 0
    %1555 = vmatpush.bf16.xpose.msra.mxu0 %v1546
    %1556 = vmatmul.bf16.gmra.mxu0 %v1543
    %v1557 = vpop.f32.mrf.mxu0
    %v1558 = vadd.f32 0.0, %v1557
    %v1559 = vpop.f32.mrf.mxu0
    %1560 = vdwg.mxu0
    %v1561 = vsel %vm1211, %v1535, -inf
    %1562 = vmax.xlane.f32.xlu0 %v1561
    %v1563 = vpop.xlane.xlu0 %1562
    %v1564 = vsel %vm1211, %v1558, -inf
    %1565 = vmax.xlane.f32.xlu0 %v1564
    %v1566 = vpop.xlane.xlu0 %1565
    %v1567 = vsub.f32 %v1535, %v1563
    %v1568 = vsub.f32 %v1558, %v1566
    %v1569 = vmul.f32 %v1567, 1.442695
    %v1570 = vpow.pop %v1569
    %v1571 = vmul.f32 %v1568, 1.442695
    %v1572 = vpow.pop %v1571
    %v1573 = vsel %vm1211, %v1570, 0.0
    %1574 = vadd.xlane.f32.xlu0 %v1573
    %v1575 = vpop.xlane.xlu0 %1574
    %v1576 = vsel %vm1211, %v1572, 0.0
    %1577 = vadd.xlane.f32.xlu0 %v1576
    %v1578 = vpop.xlane.xlu0 %1577
    %v1579 = vrcp.pop %v1575
    %v1580 = vrcp.pop %v1578
    %v1581 = vmul.f32 %v1570, %v1579
    %v1582 = vmul.f32 %v1572, %v1580
    %v1583 = vpack.c.bf16 %v1581, %v1581
    %v1584 = vpack.c.bf16 %v1582, %v1582
    %1585 = vrot.lane.b32.xlu0 %v1240, 104
    %v1586 = vpop.permute.xlu0 %1585
    %v1588 = vsel %vm1211, %v1583, 0
    %v1591 = vsel %vm1244, %v1586, 0
    %1593 = vmatpush.bf16.msra.mxu0 0
    %1594 = vmatpush.bf16.msra.mxu0 0
    %1595 = vmatpush.bf16.msra.mxu0 0
    %1596 = vmatpush.bf16.msra.mxu0 0
    %1597 = vmatpush.bf16.msra.mxu0 0
    %1598 = vmatpush.bf16.msra.mxu0 0
    %1599 = vmatpush.bf16.msra.mxu0 0
    %1600 = vmatpush.bf16.msra.mxu0 %v1591
    %1601 = vmatmul.bf16.gmra.mxu0 %v1588
    %v1602 = vpop.f32.mrf.mxu0
    %v1603 = vadd.f32 0.0, %v1602
    %v1604 = vpop.f32.mrf.mxu0
    %1605 = vdwg.mxu0
    %1606 = vrot.lane.b32.xlu0 %v1265, 104
    %v1607 = vpop.permute.xlu0 %1606
    %v1609 = vsel %vm1211, %v1584, 0
    %v1612 = vsel %vm1244, %v1607, 0
    %1614 = vmatpush.bf16.msra.mxu0 0
    %1615 = vmatpush.bf16.msra.mxu0 0
    %1616 = vmatpush.bf16.msra.mxu0 0
    %1617 = vmatpush.bf16.msra.mxu0 0
    %1618 = vmatpush.bf16.msra.mxu0 0
    %1619 = vmatpush.bf16.msra.mxu0 0
    %1620 = vmatpush.bf16.msra.mxu0 0
    %1621 = vmatpush.bf16.msra.mxu0 %v1612
    %1622 = vmatmul.bf16.gmra.mxu0 %v1609
    %v1623 = vpop.f32.mrf.mxu0
    %v1624 = vadd.f32 0.0, %v1623
    %v1625 = vpop.f32.mrf.mxu0
    %1626 = vdwg.mxu0
    %1629 = vrot.lane.b32.xlu0 %v1379, 8
    %v1630 = vpop.permute.xlu0 %1629
    %1631 = vrot.lane.b32.xlu0 %v1400, 8
    %v1632 = vpop.permute.xlu0 %1631
    %1637 = vrot.lane.b32.xlu0 %v1491, 16
    %v1638 = vpop.permute.xlu0 %1637
    %1639 = vrot.lane.b32.xlu0 %v1512, 16
    %v1640 = vpop.permute.xlu0 %1639
    %1645 = vrot.lane.b32.xlu0 %v1603, 24
    %v1646 = vpop.permute.xlu0 %1645
    %1647 = vrot.lane.b32.xlu0 %v1624, 24
    %v1648 = vpop.permute.xlu0 %1647
    %v1651 = vsel %vm303, %v1258, %v1630
    %v1652 = vsel %vm303, %v1282, %v1632
    %v1653 = vsel %vm778, %v1651, %v1638
    %v1654 = vsel %vm778, %v1652, %v1640
    %v1655 = vsel %vm781, %v1653, %v1646
    %v1656 = vsel %vm781, %v1654, %v1648
    %v1657 = vpack.c.bf16 %v1656, %v1655
    %v1658 = vld [vmem:[#allocation8] sm:$0xf]
    %v1659 = vld [vmem:[#allocation8 + $0x4] sm:$0xf]
    %v1660 = vld [vmem:[#allocation8 + $0x8] sm:$0xf]
    %v1661 = vld [vmem:[#allocation8 + $0xc] sm:$0xf]
    %v1662 = vld [vmem:[%s37] sm:$0x1]
    %v1664 = vperm.slane %v1662, 0
    %v1670 = vunpack.c.l.b16 %v1658
    %v1671 = vunpack.c.l.b16 %v1659
    %v1672 = vunpack.c.l.b16 %v1660
    %v1673 = vunpack.c.l.b16 %v1661
    %v1674 = vpack.c.b16 %v1671, %v1670
    %v1675 = vpack.c.b16 %v1673, %v1672
    %v1679 = vsel %vm238, %v1657, 0
    %1681 = vmatpush.bf16.msra.mxu0 0
    %1682 = vmatpush.bf16.msra.mxu0 0
    %1683 = vmatpush.bf16.msra.mxu0 0
    %1684 = vmatpush.bf16.msra.mxu0 0
    %1685 = vmatpush.bf16.msra.mxu0 0
    %1686 = vmatpush.bf16.msra.mxu0 0
    %1687 = vmatpush.bf16.msra.mxu0 %v1675
    %1688 = vmatpush.bf16.msra.mxu0 %v1674
    %1689 = vmatmul.bf16.gmra.mxu0 %v1679
    %v1690 = vpop.f32.mrf.mxu0
    %v1691 = vadd.f32 %v1664, %v1690
    %v1692 = vpop.f32.mrf.mxu0
    %v1693 = vadd.f32 %v1664, %v1692
    %1694 = vdwg.mxu0
    %v1695 = vadd.f32 %v885, %v1691
    %v1696 = vadd.f32 %v886, %v1693
    %v1697 = vsel %vm238, %v1695, 0.0
    %1698 = vadd.xlane.f32.xlu0 %v1697
    %v1699 = vpop.xlane.xlu0 %1698
    %v1700 = vsel %vm238, %v1696, 0.0
    %1701 = vadd.xlane.f32.xlu0 %v1700
    %v1702 = vpop.xlane.xlu0 %1701
    %v1703 = vmul.f32 %v1699, %v836
    %v1704 = vmul.f32 %v1702, %v836
    %v1705 = vsub.f32 %v1695, %v1703
    %v1706 = vsub.f32 %v1696, %v1704
    %v1707 = vmul.f32 %v1705, %v1705
    %v1708 = vmul.f32 %v1706, %v1706
    %v1709 = vsel %vm238, %v1707, 0.0
    %1710 = vadd.xlane.f32.xlu0 %v1709
    %v1711 = vpop.xlane.xlu0 %1710
    %v1712 = vsel %vm238, %v1708, 0.0
    %1713 = vadd.xlane.f32.xlu0 %v1712
    %v1714 = vpop.xlane.xlu0 %1713
    %v1715 = vmul.f32 %v1711, %v836
    %v1716 = vmul.f32 %v1714, %v836
    %v1717 = vadd.f32 %v1715, 1e-05
    %v1718 = vadd.f32 %v1716, 1e-05
    %v1719 = vrsqrt.pop %v1717
    %v1720 = vmul.f32 %v1719, %v1717
    %v1721 = vmul.f32 %v1720, %v1719
    %v1722 = vmul.f32 0.5, %v1721
    %v1723 = vsub.f32 1.5, %v1722
    %v1724 = vmul.f32 %v1719, %v1723
    %vm1725 = vweird.f32 %v1717
    %vm1726 = vweird.f32 %v1719
    %vm1727 = vmor %vm1725, %vm1726
    %v1728 = vsel %vm1727, %v1719, %v1724
    %v1729 = vrsqrt.pop %v1718
    %v1730 = vmul.f32 %v1729, %v1718
    %v1731 = vmul.f32 %v1730, %v1729
    %v1732 = vmul.f32 0.5, %v1731
    %v1733 = vsub.f32 1.5, %v1732
    %v1734 = vmul.f32 %v1729, %v1733
    %vm1735 = vweird.f32 %v1718
    %vm1736 = vweird.f32 %v1729
    %vm1737 = vmor %vm1735, %vm1736
    %v1738 = vsel %vm1737, %v1729, %v1734
    %v1739 = vmul.f32 %v1705, %v1728
    %v1740 = vmul.f32 %v1706, %v1738
    %v1741 = vld [vmem:[%s51] sm:$0x1]
    %v1743 = vperm.slane %v1741, 0
    %v1745 = vmul.f32 %v1739, %v1743
    %v1746 = vmul.f32 %v1740, %v1743
    %v1747 = vld [vmem:[%s53] sm:$0x1]
    %v1749 = vperm.slane %v1747, 0
    %v1751 = vadd.f32 %v1745, %v1749
    %v1752 = vadd.f32 %v1746, %v1749
    %v1753 = vpack.c.bf16 %v1752, %v1751
    %v1754 = vld [vmem:[#allocation10] sm:$0xf]
    %v1755 = vld [vmem:[#allocation10 + $0x4] sm:$0xf]
    %v1756 = vld [vmem:[#allocation10 + $0x8] sm:$0xf]
    %v1757 = vld [vmem:[#allocation10 + $0xc] sm:$0xf]
    %v1758 = vld [vmem:[%s41] sm:$0x1]
    %v1760 = vperm.slane %v1758, 0
    %v1766 = vunpack.c.l.b16 %v1754
    %v1767 = vunpack.c.l.b16 %v1755
    %v1768 = vunpack.c.l.b16 %v1756
    %v1769 = vunpack.c.l.b16 %v1757
    %v1770 = vpack.c.b16 %v1767, %v1766
    %v1771 = vpack.c.b16 %v1769, %v1768
    %v1775 = vsel %vm238, %v1753, 0
    %1777 = vmatpush.bf16.msra.mxu0 0
    %1778 = vmatpush.bf16.msra.mxu0 0
    %1779 = vmatpush.bf16.msra.mxu0 0
    %1780 = vmatpush.bf16.msra.mxu0 0
    %1781 = vmatpush.bf16.msra.mxu0 0
    %1782 = vmatpush.bf16.msra.mxu0 0
    %1783 = vmatpush.bf16.msra.mxu0 %v1771
    %1784 = vmatpush.bf16.msra.mxu0 %v1770
    %1785 = vmatmul.bf16.gmra.mxu0 %v1775
    %v1786 = vpop.f32.mrf.mxu0
    %v1787 = vadd.f32 %v1760, %v1786
    %v1788 = vpop.f32.mrf.mxu0
    %v1789 = vadd.f32 %v1760, %v1788
    %1790 = vdwg.mxu0
    %v1791 = vmax.f32 %v1787, 0.0
    %v1792 = vmax.f32 %v1789, 0.0
    %v1793 = vpack.c.bf16 %v1792, %v1791
    %v1794 = vld [vmem:[%s43] sm:$0xf]
    %v1795 = vld [vmem:[%s43 + $0x4] sm:$0xf]
    %v1796 = vld [vmem:[%s43 + $0x8] sm:$0xf]
    %v1797 = vld [vmem:[%s43 + $0xc] sm:$0xf]
    %v1798 = vld [vmem:[%s43 + $0x10] sm:$0xf]
    %v1799 = vld [vmem:[%s43 + $0x14] sm:$0xf]
    %v1800 = vld [vmem:[%s43 + $0x18] sm:$0xf]
    %v1801 = vld [vmem:[%s43 + $0x1c] sm:$0xf]
    %v1802 = vld [vmem:[%s45] sm:$0x1]
    %v1804 = vperm.slane %v1802, 0
    %v1814 = vunpack.c.l.b16 %v1794
    %v1815 = vunpack.c.l.b16 %v1795
    %v1816 = vunpack.c.l.b16 %v1796
    %v1817 = vunpack.c.l.b16 %v1797
    %v1818 = vunpack.c.l.b16 %v1798
    %v1819 = vunpack.c.l.b16 %v1799
    %v1820 = vunpack.c.l.b16 %v1800
    %v1821 = vunpack.c.l.b16 %v1801
    %v1822 = vpack.c.b16 %v1815, %v1814
    %v1823 = vpack.c.b16 %v1817, %v1816
    %v1824 = vpack.c.b16 %v1819, %v1818
    %v1825 = vpack.c.b16 %v1821, %v1820
    %vm1830 = vcmask 523264
    %v1832 = vsel %vm1830, %v1793, 0
    %1834 = vmatpush.bf16.msra.mxu0 0
    %1835 = vmatpush.bf16.msra.mxu0 0
    %1836 = vmatpush.bf16.msra.mxu0 0
    %1837 = vmatpush.bf16.msra.mxu0 0
    %1838 = vmatpush.bf16.msra.mxu0 %v1825
    %1839 = vmatpush.bf16.msra.mxu0 %v1824
    %1840 = vmatpush.bf16.msra.mxu0 %v1823
    %1841 = vmatpush.bf16.msra.mxu0 %v1822
    %1842 = vmatmul.bf16.gmra.mxu0 %v1832
    %v1843 = vpop.f32.mrf.mxu0
    %v1844 = vadd.f32 %v1804, %v1843
    %v1845 = vpop.f32.mrf.mxu0
    %v1846 = vadd.f32 %v1804, %v1845
    %1847 = vdwg.mxu0
    %v1848 = vadd.f32 %v1751, %v1844
    %v1849 = vadd.f32 %v1752, %v1846
    %v1850 = vsel %vm238, %v1848, 0.0
    %1851 = vadd.xlane.f32.xlu0 %v1850
    %v1852 = vpop.xlane.xlu0 %1851
    %v1853 = vsel %vm238, %v1849, 0.0
    %1854 = vadd.xlane.f32.xlu0 %v1853
    %v1855 = vpop.xlane.xlu0 %1854
    %v1856 = vmul.f32 %v1852, %v836
    %v1857 = vmul.f32 %v1855, %v836
    %v1858 = vsub.f32 %v1848, %v1856
    %v1859 = vsub.f32 %v1849, %v1857
    %v1860 = vmul.f32 %v1858, %v1858
    %v1861 = vmul.f32 %v1859, %v1859
    %v1862 = vsel %vm238, %v1860, 0.0
    %1863 = vadd.xlane.f32.xlu0 %v1862
    %v1864 = vpop.xlane.xlu0 %1863
    %v1865 = vsel %vm238, %v1861, 0.0
    %1866 = vadd.xlane.f32.xlu0 %v1865
    %v1867 = vpop.xlane.xlu0 %1866
    %v1868 = vmul.f32 %v1864, %v836
    %v1869 = vmul.f32 %v1867, %v836
    %v1870 = vadd.f32 %v1868, 1e-05
    %v1871 = vadd.f32 %v1869, 1e-05
    %v1872 = vrsqrt.pop %v1870
    %v1873 = vmul.f32 %v1872, %v1870
    %v1874 = vmul.f32 %v1873, %v1872
    %v1875 = vmul.f32 0.5, %v1874
    %v1876 = vsub.f32 1.5, %v1875
    %v1877 = vmul.f32 %v1872, %v1876
    %vm1878 = vweird.f32 %v1870
    %vm1879 = vweird.f32 %v1872
    %vm1880 = vmor %vm1878, %vm1879
    %v1881 = vsel %vm1880, %v1872, %v1877
    %v1882 = vrsqrt.pop %v1871
    %v1883 = vmul.f32 %v1882, %v1871
    %v1884 = vmul.f32 %v1883, %v1882
    %v1885 = vmul.f32 0.5, %v1884
    %v1886 = vsub.f32 1.5, %v1885
    %v1887 = vmul.f32 %v1882, %v1886
    %vm1888 = vweird.f32 %v1871
    %vm1889 = vweird.f32 %v1882
    %vm1890 = vmor %vm1888, %vm1889
    %v1891 = vsel %vm1890, %v1882, %v1887
    %v1892 = vmul.f32 %v1858, %v1881
    %v1893 = vmul.f32 %v1859, %v1891
    %v1894 = vld [vmem:[%s55] sm:$0x1]
    %v1896 = vperm.slane %v1894, 0
    %v1898 = vmul.f32 %v1892, %v1896
    %v1899 = vmul.f32 %v1893, %v1896
    %v1900 = vld [vmem:[%s57] sm:$0x1]
    %v1902 = vperm.slane %v1900, 0
    %v1904 = vadd.f32 %v1898, %v1902
    %v1905 = vadd.f32 %v1899, %v1902
    %1906 = vst.msk [vmem:[#allocation11] sm:$0xff] %vm238, %v1904
    %1907 = vst.msk [vmem:[#allocation11 + $0x8] sm:$0xff] %vm238, %v1905
    // Predicated region
    $region138: #{tpu_custom_call.1} parent=1 // pred_check
      _
    $region139: #{tpu_custom_call.1} parent=1 // pred_check_branch
      %1909 = sbr.rel (0) target = $region141
    $region140: #{tpu_custom_call.1} parent=1 // pred_region
      %1911 = vsyncadd [#allocation4], 0
      %s1912 = sshll.u32 [#allocation11], 4
      %s1913 = int_to_ptr.vmem [resolvable:$true] %s1912
      %s1914 = sshll.u32 %s59, 4
      %s1915 = int_to_ptr.hbm [resolvable:$true] %s1914
      %1920 = dma.vmem_to_hbm [thread:$0]  %s1913, 256, %s1915, [#allocation4], 128, 128, 8
    $region141: #{tpu_custom_call.1} parent=1 // pred_fallthru
      _
    // Predicated region
    $region142: #{tpu_custom_call.1} parent=1 // pred_check
      _
    $region143: #{tpu_custom_call.1} parent=1 // pred_check_branch
      %1922 = sbr.rel (0) target = $region145
    $region144: #{tpu_custom_call.1} parent=1 // pred_region
      %1924 = dma.done [#allocation4], 256
    $region145: #{tpu_custom_call.1} parent=1 // pred_fallthru
      _
    %1925 = vsyncpa [#allocation3], 1
    %1926 = vsyncpa [#allocation6], 1
    %1927 = vsyncpa [#allocation9], 1
    %1928 = vsyncpa [#allocation4], 1

</llo_original>
